<compile_context>
chip_gen: v7x
topology: tpu7x:2x2x1
jax: 0.10.0
libtpu: 0.0.40
codegen_flags: <defaults>
</compile_context>

<pallas_src>
import functools
import math

import jax
import jax.numpy as jnp
from jax import lax
from jax.experimental import pallas as pl
from jax.experimental.pallas import tpu as pltpu


def _vmem_capacity_bytes():
    """Physical VMEM of the attached TPU, with a conservative (v7x) fallback."""
    try:
        info = pltpu.get_tpu_info()
        cap = getattr(info, "vmem_capacity_bytes", None)
        if cap:
            return int(cap)
    except Exception:
        pass
    return 64 * 1024 * 1024


def _causal_temporal_conv_kernel(x_ref, w_ref, b_ref, o_ref, *,
                                 kt, st, t_pad, lane_strip):
    """One grid step = one (batch, lane-tile) of the flattened H*W axis.

    x_ref: (1, C_in,  T,     hw_t)  input block, full temporal extent (VMEM)
    w_ref: (kt*C_out*C_in,)         conv weights as scalars (SMEM, f32)
    b_ref: (C_out,)                 bias (SMEM, f32)
    o_ref: (1, C_out, T_out, hw_t)  output block (VMEM)
    """
    _, c_in, _t_in, hw_t = x_ref.shape
    _, c_out, t_out, _ = o_ref.shape
    f32 = jnp.float32

    # Hoist every scalar parameter read out of the lane-strip loop
    # (one SMEM read per weight/bias per grid step).
    wv = [[[w_ref[(dt * c_out + co) * c_in + ci] for co in range(c_out)]
           for ci in range(c_in)]
          for dt in range(kt)]
    bv = [b_ref[co] for co in range(c_out)]

    # Strip-mine the lane axis so the C_out f32 accumulators plus one tap
    # plane stay resident in vregs; each strip produces exactly one dense
    # (T_out, strip) store per output channel.
    for off in range(0, hw_t, lane_strip):
        w_lanes = min(lane_strip, hw_t - off)
        lanes = slice(off, off + w_lanes)

        accs = [jnp.full((t_out, w_lanes), bv[co], dtype=f32)
                for co in range(c_out)]

        for ci in range(c_in):
            for dt in range(kt):
                # First output frame whose tap `dt` hits a real input frame.
                t0 = max(0, -(-(t_pad - dt) // st))     # ceil((t_pad - dt)/st)
                n_valid = t_out - t0
                if n_valid <= 0:
                    continue                 # tap lies entirely in the causal pad
                tau0 = t0 * st + dt - t_pad  # >= 0 by construction
                if st == 1:
                    tap = x_ref[0, ci, tau0:tau0 + n_valid, lanes]
                else:
                    # TODO(synk): strided temporal taps are unexercised by the
                    # module default (stride=(1,1,1)).
                    tap = x_ref[0, ci, pl.ds(tau0, n_valid, st), lanes]
                tap = tap.astype(f32)        # in-VMEM cast (no host cast pass)
                if t0 > 0:                   # causal zero-padding of the tap
                    tap = jnp.concatenate(
                        [jnp.zeros((t0, w_lanes), f32), tap], axis=0)
                for co in range(c_out):
                    accs[co] = accs[co] + wv[dt][ci][co] * tap

        for co in range(c_out):
            o_ref[0, co, :, lanes] = accs[co].astype(o_ref.dtype)


class Emu3VisionVQCausalConv3d:
    """JAX/Pallas port of the PyTorch Emu3VisionVQCausalConv3d forward."""

    def __init__(self, in_channel, out_channel, kernel_size=(3, 1, 1),
                 stride=(1, 1, 1), *, key):
        if isinstance(kernel_size, int):
            kernel_size = (kernel_size,) * 3
        if isinstance(stride, int):
            stride = (stride,) * 3
        kernel_size = tuple(kernel_size)
        stride = tuple(stride)
        # TODO(synk): only spatial kernel/stride == 1 (the module default) is
        # lowered to Pallas; spatial taps would need a halo exchange across
        # the flattened H*W lane tiles.
        assert kernel_size[1:] == (1, 1) and stride[1:] == (1, 1), (
            "Pallas port covers spatial kernel/stride == 1 (module default).")
        # TODO(synk): wide-channel variants (>16x16) would want a
        # channels-on-sublanes MXU layout instead of the per-channel VPU FMA
        # path used here (the Emu3 encoder uses these convs at z_channels=4..8).
        assert in_channel * out_channel <= 256, (
            "VPU scalar-FMA path is scoped to small channel counts.")

        self.in_channel = in_channel
        self.out_channel = out_channel
        self.kernel_size = kernel_size
        self.stride = stride

        # Same padding computation as the PyTorch module (F.pad ordering:
        # (W_left, W_right, H_left, H_right, T_left, T_right)).
        hw_pad = [k - s for k, s in zip(kernel_size[1:], stride[1:])]
        padding = tuple()
        for p in hw_pad[::-1]:
            padding += (p // 2 + p % 2, p // 2)
        padding += (2, 0)  # causal temporal pad, hardcoded as in the module
        self.padding = padding

        # Deterministic parameter init (mimics PyTorch Conv3d default bounds).
        kw_key, kb_key = jax.random.split(key)
        kt, kh, kw = kernel_size
        fan_in = in_channel * kt * kh * kw
        bound = 1.0 / math.sqrt(fan_in)
        self.weight = jax.random.uniform(
            kw_key, (out_channel, in_channel, kt, kh, kw),
            minval=-bound, maxval=bound, dtype=jnp.float32)
        self.bias = jax.random.uniform(
            kb_key, (out_channel,), minval=-bound, maxval=bound,
            dtype=jnp.float32)

        # SMEM-side layouts, precomputed once: flat (kt, C_out, C_in) weight
        # and (C_out,) bias, both f32 scalars.
        self._w_flat = jnp.transpose(
            self.weight[:, :, :, 0, 0], (2, 0, 1)).reshape(-1)
        self._b_flat = self.bias

    # ------------------------------------------------------------------ tiling
    def _plan(self, batch, c_in, c_out, t_in, t_out, hw, in_dtype, out_dtype):
        cap = _vmem_capacity_bytes()
        vmem_limit = int(cap * 0.75)          # ~96 MiB on v5e/v6e, 48 MiB on v7x
        block_budget = vmem_limit // 3        # in+out blocks, double-buffered

        per_lane = (c_in * t_in * jnp.dtype(in_dtype).itemsize
                    + c_out * t_out * jnp.dtype(out_dtype).itemsize)

        if hw % 128 != 0:
            # Block last-dim must be a multiple of 128 OR the full extent.
            # TODO(synk): a huge non-128-divisible H*W could exceed the VMEM
            # budget with this single-tile fallback.
            hw_t = hw
        else:
            cap_lanes = max(128, (block_budget // (per_lane)) // 128 * 128)
            hw_t = min(hw, cap_lanes)
            # Prefer an exact divisor of HW (dense tiles, no ragged tail) when
            # one exists within 2x of the cap -- avoids the old 128-lane cliff.
            d = hw_t
            while d > 128 and hw % d != 0:
                d -= 128
            if hw % d == 0 and 2 * d >= hw_t:
                hw_t = d
            # Megacore (v7x): guarantee at least two grid steps in total.
            if batch == 1 and hw_t >= hw and hw >= 256:
                hw_t = ((hw // 2 + 127) // 128) * 128

        # Lane strip inside the kernel: keep the resident C_out accumulators
        # plus one tap plane comfortably inside the 64-vreg register file.
        per_lane_live = (c_out * t_out + 2 * t_in) * 4
        lane_strip = 128
        for cand in (2048, 1024, 512, 256, 128):
            if cand * per_lane_live <= 96 * 1024:
                lane_strip = cand
                break
        lane_strip = min(lane_strip, hw_t)
        return hw_t, lane_strip, vmem_limit

    # ----------------------------------------------------------------- forward
    def __call__(self, x, out_dtype=None):
        B, C, T, H, W = x.shape
        assert C == self.in_channel
        kt, st = self.kernel_size[0], self.stride[0]
        t_pad = self.padding[4]                       # causal left pad (= 2)
        T_out = (T + t_pad - kt) // st + 1
        assert T_out >= 1
        C_out = self.out_channel
        HW = H * W
        out_dtype = x.dtype if out_dtype is None else out_dtype

        # (B, C, T, H, W) -> (B, C, T, H*W): metadata-only view; H*W lands on
        # lanes, T on sublanes.  No transpose, no pad, no cast pass.
        x4 = x.reshape(B, C, T, HW)

        hw_t, lane_strip, vmem_limit = self._plan(
            B, C, C_out, T, T_out, HW, x.dtype, out_dtype)
        grid = (B, pl.cdiv(HW, hw_t))

        kernel = functools.partial(
            _causal_temporal_conv_kernel,
            kt=kt, st=st, t_pad=t_pad, lane_strip=lane_strip)

        out = pl.pallas_call(
            kernel,
            out_shape=jax.ShapeDtypeStruct((B, C_out, T_out, HW), out_dtype),
            grid=grid,
            in_specs=[
                # Full temporal extent per (batch, lane-tile): every input
                # element is DMA'd from HBM exactly once.
                pl.BlockSpec((1, C, T, hw_t), lambda b, m: (b, 0, 0, m)),
                # Tiny weight / bias tables as SMEM scalars.
                pl.BlockSpec(memory_space=pltpu.MemorySpace.SMEM),
                pl.BlockSpec(memory_space=pltpu.MemorySpace.SMEM),
            ],
            out_specs=pl.BlockSpec((1, C_out, T_out, hw_t),
                                   lambda b, m: (b, 0, 0, m)),
            compiler_params=pltpu.CompilerParams(
                dimension_semantics=("parallel", "parallel"),
                vmem_limit_bytes=vmem_limit),
        )(x4, self._w_flat, self._b_flat)

        # (B, C_out, T_out, H*W) -> (B, C_out, T_out, H, W): free view.
        return out.reshape(B, C_out, T_out, H, W)

    # --------------------------------------------------------------- reference
    def reference(self, x):
        """Pure-JAX f32 reference (same semantics as the PyTorch forward)."""
        Wl, Wr, Hl, Hr, Tl, Tr = self.padding
        xp = jnp.pad(x.astype(jnp.float32),
                     ((0, 0), (0, 0), (Tl, Tr), (Hl, Hr), (Wl, Wr)))
        y = lax.conv_general_dilated(
            xp, self.weight, window_strides=self.stride, padding="VALID",
            dimension_numbers=("NCDHW", "OIDHW", "NCDHW"),
            precision=lax.Precision.HIGHEST)
        return y + self.bias.reshape(1, -1, 1, 1, 1)


if __name__ == "__main__":
    key = jax.random.PRNGKey(0)
    kx, kparams = jax.random.split(key)

    B, C_in, T, H, W = 2, 4, 8, 16, 16
    C_out = 8

    x = jax.random.normal(kx, (B, C_in, T, H, W), dtype=jnp.float32)
    module = Emu3VisionVQCausalConv3d(C_in, C_out, key=kparams)

    # f32 in -> f32 out (exact module semantics; f32 accumulation in-kernel).
    y = module(x)
    jax.block_until_ready(y)
    assert y.shape == (B, C_out, T, H, W), y.shape
    assert y.dtype == x.dtype

    y_ref = module.reference(x)
    err = float(jnp.max(jnp.abs(y - y_ref)))
    assert err < 1e-4, err

    # bf16 producer/consumer path (the perf-recommended configuration):
    # bf16 input blocks, f32 in-vreg accumulation, bf16 stores.
    xb = x.astype(jnp.bfloat16)
    yb = module(xb)
    jax.block_until_ready(yb)
    assert yb.dtype == jnp.bfloat16
    yb_ref = module.reference(xb.astype(jnp.float32))
    errb = float(jnp.max(jnp.abs(yb.astype(jnp.float32) - yb_ref)))
    assert errb < 3e-2, errb

    print("KERNEL_OK")
</pallas_src>

<mosaic_0001>
module attributes {stable_mosaic.version = 11 : i64} {
  func.func @_causal_temporal_conv_kernel(%arg0: i32, %arg1: i32, %arg2: memref<1x4x8x256xf32, #tpu.memory_space<vmem>>, %arg3: memref<96xf32, #tpu.memory_space<smem>>, %arg4: memref<8xf32, #tpu.memory_space<smem>>, %arg5: memref<1x8x8x256xf32, #tpu.memory_space<vmem>>) attributes {dimension_semantics = [#tpu.dimension_semantics<parallel>, #tpu.dimension_semantics<parallel>], iteration_bounds = array<i64: 2, 1>, scalar_prefetch = 0 : i64, scratch_operands = 0 : i64, tpu.core_type = #tpu.core_type<tc>, window_params = [{transform_indices = @transform_0, window_bounds = array<i64: 1, 4, 8, 256>}, {transform_indices = @transform_1, window_bounds = array<i64: 96>}, {transform_indices = @transform_2, window_bounds = array<i64: 8>}, {transform_indices = @transform_3, window_bounds = array<i64: 1, 8, 8, 256>}]} {
    %c0 = arith.constant 0 : index
    %0 = memref.load %arg3[%c0] : memref<96xf32, #tpu.memory_space<smem>>
    %c4 = arith.constant 4 : index
    %1 = memref.load %arg3[%c4] : memref<96xf32, #tpu.memory_space<smem>>
    %c8 = arith.constant 8 : index
    %2 = memref.load %arg3[%c8] : memref<96xf32, #tpu.memory_space<smem>>
    %c12 = arith.constant 12 : index
    %3 = memref.load %arg3[%c12] : memref<96xf32, #tpu.memory_space<smem>>
    %c16 = arith.constant 16 : index
    %4 = memref.load %arg3[%c16] : memref<96xf32, #tpu.memory_space<smem>>
    %c20 = arith.constant 20 : index
    %5 = memref.load %arg3[%c20] : memref<96xf32, #tpu.memory_space<smem>>
    %c24 = arith.constant 24 : index
    %6 = memref.load %arg3[%c24] : memref<96xf32, #tpu.memory_space<smem>>
    %c28 = arith.constant 28 : index
    %7 = memref.load %arg3[%c28] : memref<96xf32, #tpu.memory_space<smem>>
    %c1 = arith.constant 1 : index
    %8 = memref.load %arg3[%c1] : memref<96xf32, #tpu.memory_space<smem>>
    %c5 = arith.constant 5 : index
    %9 = memref.load %arg3[%c5] : memref<96xf32, #tpu.memory_space<smem>>
    %c9 = arith.constant 9 : index
    %10 = memref.load %arg3[%c9] : memref<96xf32, #tpu.memory_space<smem>>
    %c13 = arith.constant 13 : index
    %11 = memref.load %arg3[%c13] : memref<96xf32, #tpu.memory_space<smem>>
    %c17 = arith.constant 17 : index
    %12 = memref.load %arg3[%c17] : memref<96xf32, #tpu.memory_space<smem>>
    %c21 = arith.constant 21 : index
    %13 = memref.load %arg3[%c21] : memref<96xf32, #tpu.memory_space<smem>>
    %c25 = arith.constant 25 : index
    %14 = memref.load %arg3[%c25] : memref<96xf32, #tpu.memory_space<smem>>
    %c29 = arith.constant 29 : index
    %15 = memref.load %arg3[%c29] : memref<96xf32, #tpu.memory_space<smem>>
    %c2 = arith.constant 2 : index
    %16 = memref.load %arg3[%c2] : memref<96xf32, #tpu.memory_space<smem>>
    %c6 = arith.constant 6 : index
    %17 = memref.load %arg3[%c6] : memref<96xf32, #tpu.memory_space<smem>>
    %c10 = arith.constant 10 : index
    %18 = memref.load %arg3[%c10] : memref<96xf32, #tpu.memory_space<smem>>
    %c14 = arith.constant 14 : index
    %19 = memref.load %arg3[%c14] : memref<96xf32, #tpu.memory_space<smem>>
    %c18 = arith.constant 18 : index
    %20 = memref.load %arg3[%c18] : memref<96xf32, #tpu.memory_space<smem>>
    %c22 = arith.constant 22 : index
    %21 = memref.load %arg3[%c22] : memref<96xf32, #tpu.memory_space<smem>>
    %c26 = arith.constant 26 : index
    %22 = memref.load %arg3[%c26] : memref<96xf32, #tpu.memory_space<smem>>
    %c30 = arith.constant 30 : index
    %23 = memref.load %arg3[%c30] : memref<96xf32, #tpu.memory_space<smem>>
    %c3 = arith.constant 3 : index
    %24 = memref.load %arg3[%c3] : memref<96xf32, #tpu.memory_space<smem>>
    %c7 = arith.constant 7 : index
    %25 = memref.load %arg3[%c7] : memref<96xf32, #tpu.memory_space<smem>>
    %c11 = arith.constant 11 : index
    %26 = memref.load %arg3[%c11] : memref<96xf32, #tpu.memory_space<smem>>
    %c15 = arith.constant 15 : index
    %27 = memref.load %arg3[%c15] : memref<96xf32, #tpu.memory_space<smem>>
    %c19 = arith.constant 19 : index
    %28 = memref.load %arg3[%c19] : memref<96xf32, #tpu.memory_space<smem>>
    %c23 = arith.constant 23 : index
    %29 = memref.load %arg3[%c23] : memref<96xf32, #tpu.memory_space<smem>>
    %c27 = arith.constant 27 : index
    %30 = memref.load %arg3[%c27] : memref<96xf32, #tpu.memory_space<smem>>
    %c31 = arith.constant 31 : index
    %31 = memref.load %arg3[%c31] : memref<96xf32, #tpu.memory_space<smem>>
    %c32 = arith.constant 32 : index
    %32 = memref.load %arg3[%c32] : memref<96xf32, #tpu.memory_space<smem>>
    %c36 = arith.constant 36 : index
    %33 = memref.load %arg3[%c36] : memref<96xf32, #tpu.memory_space<smem>>
    %c40 = arith.constant 40 : index
    %34 = memref.load %arg3[%c40] : memref<96xf32, #tpu.memory_space<smem>>
    %c44 = arith.constant 44 : index
    %35 = memref.load %arg3[%c44] : memref<96xf32, #tpu.memory_space<smem>>
    %c48 = arith.constant 48 : index
    %36 = memref.load %arg3[%c48] : memref<96xf32, #tpu.memory_space<smem>>
    %c52 = arith.constant 52 : index
    %37 = memref.load %arg3[%c52] : memref<96xf32, #tpu.memory_space<smem>>
    %c56 = arith.constant 56 : index
    %38 = memref.load %arg3[%c56] : memref<96xf32, #tpu.memory_space<smem>>
    %c60 = arith.constant 60 : index
    %39 = memref.load %arg3[%c60] : memref<96xf32, #tpu.memory_space<smem>>
    %c33 = arith.constant 33 : index
    %40 = memref.load %arg3[%c33] : memref<96xf32, #tpu.memory_space<smem>>
    %c37 = arith.constant 37 : index
    %41 = memref.load %arg3[%c37] : memref<96xf32, #tpu.memory_space<smem>>
    %c41 = arith.constant 41 : index
    %42 = memref.load %arg3[%c41] : memref<96xf32, #tpu.memory_space<smem>>
    %c45 = arith.constant 45 : index
    %43 = memref.load %arg3[%c45] : memref<96xf32, #tpu.memory_space<smem>>
    %c49 = arith.constant 49 : index
    %44 = memref.load %arg3[%c49] : memref<96xf32, #tpu.memory_space<smem>>
    %c53 = arith.constant 53 : index
    %45 = memref.load %arg3[%c53] : memref<96xf32, #tpu.memory_space<smem>>
    %c57 = arith.constant 57 : index
    %46 = memref.load %arg3[%c57] : memref<96xf32, #tpu.memory_space<smem>>
    %c61 = arith.constant 61 : index
    %47 = memref.load %arg3[%c61] : memref<96xf32, #tpu.memory_space<smem>>
    %c34 = arith.constant 34 : index
    %48 = memref.load %arg3[%c34] : memref<96xf32, #tpu.memory_space<smem>>
    %c38 = arith.constant 38 : index
    %49 = memref.load %arg3[%c38] : memref<96xf32, #tpu.memory_space<smem>>
    %c42 = arith.constant 42 : index
    %50 = memref.load %arg3[%c42] : memref<96xf32, #tpu.memory_space<smem>>
    %c46 = arith.constant 46 : index
    %51 = memref.load %arg3[%c46] : memref<96xf32, #tpu.memory_space<smem>>
    %c50 = arith.constant 50 : index
    %52 = memref.load %arg3[%c50] : memref<96xf32, #tpu.memory_space<smem>>
    %c54 = arith.constant 54 : index
    %53 = memref.load %arg3[%c54] : memref<96xf32, #tpu.memory_space<smem>>
    %c58 = arith.constant 58 : index
    %54 = memref.load %arg3[%c58] : memref<96xf32, #tpu.memory_space<smem>>
    %c62 = arith.constant 62 : index
    %55 = memref.load %arg3[%c62] : memref<96xf32, #tpu.memory_space<smem>>
    %c35 = arith.constant 35 : index
    %56 = memref.load %arg3[%c35] : memref<96xf32, #tpu.memory_space<smem>>
    %c39 = arith.constant 39 : index
    %57 = memref.load %arg3[%c39] : memref<96xf32, #tpu.memory_space<smem>>
    %c43 = arith.constant 43 : index
    %58 = memref.load %arg3[%c43] : memref<96xf32, #tpu.memory_space<smem>>
    %c47 = arith.constant 47 : index
    %59 = memref.load %arg3[%c47] : memref<96xf32, #tpu.memory_space<smem>>
    %c51 = arith.constant 51 : index
    %60 = memref.load %arg3[%c51] : memref<96xf32, #tpu.memory_space<smem>>
    %c55 = arith.constant 55 : index
    %61 = memref.load %arg3[%c55] : memref<96xf32, #tpu.memory_space<smem>>
    %c59 = arith.constant 59 : index
    %62 = memref.load %arg3[%c59] : memref<96xf32, #tpu.memory_space<smem>>
    %c63 = arith.constant 63 : index
    %63 = memref.load %arg3[%c63] : memref<96xf32, #tpu.memory_space<smem>>
    %c64 = arith.constant 64 : index
    %64 = memref.load %arg3[%c64] : memref<96xf32, #tpu.memory_space<smem>>
    %c68 = arith.constant 68 : index
    %65 = memref.load %arg3[%c68] : memref<96xf32, #tpu.memory_space<smem>>
    %c72 = arith.constant 72 : index
    %66 = memref.load %arg3[%c72] : memref<96xf32, #tpu.memory_space<smem>>
    %c76 = arith.constant 76 : index
    %67 = memref.load %arg3[%c76] : memref<96xf32, #tpu.memory_space<smem>>
    %c80 = arith.constant 80 : index
    %68 = memref.load %arg3[%c80] : memref<96xf32, #tpu.memory_space<smem>>
    %c84 = arith.constant 84 : index
    %69 = memref.load %arg3[%c84] : memref<96xf32, #tpu.memory_space<smem>>
    %c88 = arith.constant 88 : index
    %70 = memref.load %arg3[%c88] : memref<96xf32, #tpu.memory_space<smem>>
    %c92 = arith.constant 92 : index
    %71 = memref.load %arg3[%c92] : memref<96xf32, #tpu.memory_space<smem>>
    %c65 = arith.constant 65 : index
    %72 = memref.load %arg3[%c65] : memref<96xf32, #tpu.memory_space<smem>>
    %c69 = arith.constant 69 : index
    %73 = memref.load %arg3[%c69] : memref<96xf32, #tpu.memory_space<smem>>
    %c73 = arith.constant 73 : index
    %74 = memref.load %arg3[%c73] : memref<96xf32, #tpu.memory_space<smem>>
    %c77 = arith.constant 77 : index
    %75 = memref.load %arg3[%c77] : memref<96xf32, #tpu.memory_space<smem>>
    %c81 = arith.constant 81 : index
    %76 = memref.load %arg3[%c81] : memref<96xf32, #tpu.memory_space<smem>>
    %c85 = arith.constant 85 : index
    %77 = memref.load %arg3[%c85] : memref<96xf32, #tpu.memory_space<smem>>
    %c89 = arith.constant 89 : index
    %78 = memref.load %arg3[%c89] : memref<96xf32, #tpu.memory_space<smem>>
    %c93 = arith.constant 93 : index
    %79 = memref.load %arg3[%c93] : memref<96xf32, #tpu.memory_space<smem>>
    %c66 = arith.constant 66 : index
    %80 = memref.load %arg3[%c66] : memref<96xf32, #tpu.memory_space<smem>>
    %c70 = arith.constant 70 : index
    %81 = memref.load %arg3[%c70] : memref<96xf32, #tpu.memory_space<smem>>
    %c74 = arith.constant 74 : index
    %82 = memref.load %arg3[%c74] : memref<96xf32, #tpu.memory_space<smem>>
    %c78 = arith.constant 78 : index
    %83 = memref.load %arg3[%c78] : memref<96xf32, #tpu.memory_space<smem>>
    %c82 = arith.constant 82 : index
    %84 = memref.load %arg3[%c82] : memref<96xf32, #tpu.memory_space<smem>>
    %c86 = arith.constant 86 : index
    %85 = memref.load %arg3[%c86] : memref<96xf32, #tpu.memory_space<smem>>
    %c90 = arith.constant 90 : index
    %86 = memref.load %arg3[%c90] : memref<96xf32, #tpu.memory_space<smem>>
    %c94 = arith.constant 94 : index
    %87 = memref.load %arg3[%c94] : memref<96xf32, #tpu.memory_space<smem>>
    %c67 = arith.constant 67 : index
    %88 = memref.load %arg3[%c67] : memref<96xf32, #tpu.memory_space<smem>>
    %c71 = arith.constant 71 : index
    %89 = memref.load %arg3[%c71] : memref<96xf32, #tpu.memory_space<smem>>
    %c75 = arith.constant 75 : index
    %90 = memref.load %arg3[%c75] : memref<96xf32, #tpu.memory_space<smem>>
    %c79 = arith.constant 79 : index
    %91 = memref.load %arg3[%c79] : memref<96xf32, #tpu.memory_space<smem>>
    %c83 = arith.constant 83 : index
    %92 = memref.load %arg3[%c83] : memref<96xf32, #tpu.memory_space<smem>>
    %c87 = arith.constant 87 : index
    %93 = memref.load %arg3[%c87] : memref<96xf32, #tpu.memory_space<smem>>
    %c91 = arith.constant 91 : index
    %94 = memref.load %arg3[%c91] : memref<96xf32, #tpu.memory_space<smem>>
    %c95 = arith.constant 95 : index
    %95 = memref.load %arg3[%c95] : memref<96xf32, #tpu.memory_space<smem>>
    %c0_0 = arith.constant 0 : index
    %96 = memref.load %arg4[%c0_0] : memref<8xf32, #tpu.memory_space<smem>>
    %c1_1 = arith.constant 1 : index
    %97 = memref.load %arg4[%c1_1] : memref<8xf32, #tpu.memory_space<smem>>
    %c2_2 = arith.constant 2 : index
    %98 = memref.load %arg4[%c2_2] : memref<8xf32, #tpu.memory_space<smem>>
    %c3_3 = arith.constant 3 : index
    %99 = memref.load %arg4[%c3_3] : memref<8xf32, #tpu.memory_space<smem>>
    %c4_4 = arith.constant 4 : index
    %100 = memref.load %arg4[%c4_4] : memref<8xf32, #tpu.memory_space<smem>>
    %c5_5 = arith.constant 5 : index
    %101 = memref.load %arg4[%c5_5] : memref<8xf32, #tpu.memory_space<smem>>
    %c6_6 = arith.constant 6 : index
    %102 = memref.load %arg4[%c6_6] : memref<8xf32, #tpu.memory_space<smem>>
    %c7_7 = arith.constant 7 : index
    %103 = memref.load %arg4[%c7_7] : memref<8xf32, #tpu.memory_space<smem>>
    %104 = vector.broadcast %96 : f32 to vector<8x256xf32>
    %105 = vector.broadcast %97 : f32 to vector<8x256xf32>
    %106 = vector.broadcast %98 : f32 to vector<8x256xf32>
    %107 = vector.broadcast %99 : f32 to vector<8x256xf32>
    %108 = vector.broadcast %100 : f32 to vector<8x256xf32>
    %109 = vector.broadcast %101 : f32 to vector<8x256xf32>
    %110 = vector.broadcast %102 : f32 to vector<8x256xf32>
    %111 = vector.broadcast %103 : f32 to vector<8x256xf32>
    %c0_8 = arith.constant 0 : index
    %c0_9 = arith.constant 0 : index
    %c0_10 = arith.constant 0 : index
    %c0_11 = arith.constant 0 : index
    %112 = vector.load %arg2[%c0_8, %c0_9, %c0_10, %c0_11] : memref<1x4x8x256xf32, #tpu.memory_space<vmem>>, vector<1x1x6x256xf32>
    %113 = vector.shape_cast %112 : vector<1x1x6x256xf32> to vector<6x256xf32>
    %cst = arith.constant 0.000000e+00 : f32
    %114 = vector.broadcast %cst : f32 to vector<2x256xf32>
    %115 = tpu.concatenate %114, %113 in 0 : vector<2x256xf32>, vector<6x256xf32> -> vector<8x256xf32>
    %116 = vector.broadcast %0 : f32 to vector<8x256xf32>
    %117 = arith.mulf %116, %115 : vector<8x256xf32>
    %118 = arith.addf %104, %117 : vector<8x256xf32>
    %119 = vector.broadcast %1 : f32 to vector<8x256xf32>
    %120 = arith.mulf %119, %115 : vector<8x256xf32>
    %121 = arith.addf %105, %120 : vector<8x256xf32>
    %122 = vector.broadcast %2 : f32 to vector<8x256xf32>
    %123 = arith.mulf %122, %115 : vector<8x256xf32>
    %124 = arith.addf %106, %123 : vector<8x256xf32>
    %125 = vector.broadcast %3 : f32 to vector<8x256xf32>
    %126 = arith.mulf %125, %115 : vector<8x256xf32>
    %127 = arith.addf %107, %126 : vector<8x256xf32>
    %128 = vector.broadcast %4 : f32 to vector<8x256xf32>
    %129 = arith.mulf %128, %115 : vector<8x256xf32>
    %130 = arith.addf %108, %129 : vector<8x256xf32>
    %131 = vector.broadcast %5 : f32 to vector<8x256xf32>
    %132 = arith.mulf %131, %115 : vector<8x256xf32>
    %133 = arith.addf %109, %132 : vector<8x256xf32>
    %134 = vector.broadcast %6 : f32 to vector<8x256xf32>
    %135 = arith.mulf %134, %115 : vector<8x256xf32>
    %136 = arith.addf %110, %135 : vector<8x256xf32>
    %137 = vector.broadcast %7 : f32 to vector<8x256xf32>
    %138 = arith.mulf %137, %115 : vector<8x256xf32>
    %139 = arith.addf %111, %138 : vector<8x256xf32>
    %c0_12 = arith.constant 0 : index
    %c0_13 = arith.constant 0 : index
    %c0_14 = arith.constant 0 : index
    %c0_15 = arith.constant 0 : index
    %140 = vector.load %arg2[%c0_12, %c0_13, %c0_14, %c0_15] : memref<1x4x8x256xf32, #tpu.memory_space<vmem>>, vector<1x1x7x256xf32>
    %141 = vector.shape_cast %140 : vector<1x1x7x256xf32> to vector<7x256xf32>
    %cst_16 = arith.constant 0.000000e+00 : f32
    %142 = vector.broadcast %cst_16 : f32 to vector<1x256xf32>
    %143 = tpu.concatenate %142, %141 in 0 : vector<1x256xf32>, vector<7x256xf32> -> vector<8x256xf32>
    %144 = vector.broadcast %32 : f32 to vector<8x256xf32>
    %145 = arith.mulf %144, %143 : vector<8x256xf32>
    %146 = arith.addf %118, %145 : vector<8x256xf32>
    %147 = vector.broadcast %33 : f32 to vector<8x256xf32>
    %148 = arith.mulf %147, %143 : vector<8x256xf32>
    %149 = arith.addf %121, %148 : vector<8x256xf32>
    %150 = vector.broadcast %34 : f32 to vector<8x256xf32>
    %151 = arith.mulf %150, %143 : vector<8x256xf32>
    %152 = arith.addf %124, %151 : vector<8x256xf32>
    %153 = vector.broadcast %35 : f32 to vector<8x256xf32>
    %154 = arith.mulf %153, %143 : vector<8x256xf32>
    %155 = arith.addf %127, %154 : vector<8x256xf32>
    %156 = vector.broadcast %36 : f32 to vector<8x256xf32>
    %157 = arith.mulf %156, %143 : vector<8x256xf32>
    %158 = arith.addf %130, %157 : vector<8x256xf32>
    %159 = vector.broadcast %37 : f32 to vector<8x256xf32>
    %160 = arith.mulf %159, %143 : vector<8x256xf32>
    %161 = arith.addf %133, %160 : vector<8x256xf32>
    %162 = vector.broadcast %38 : f32 to vector<8x256xf32>
    %163 = arith.mulf %162, %143 : vector<8x256xf32>
    %164 = arith.addf %136, %163 : vector<8x256xf32>
    %165 = vector.broadcast %39 : f32 to vector<8x256xf32>
    %166 = arith.mulf %165, %143 : vector<8x256xf32>
    %167 = arith.addf %139, %166 : vector<8x256xf32>
    %c0_17 = arith.constant 0 : index
    %c0_18 = arith.constant 0 : index
    %c0_19 = arith.constant 0 : index
    %c0_20 = arith.constant 0 : index
    %168 = vector.load %arg2[%c0_17, %c0_18, %c0_19, %c0_20] : memref<1x4x8x256xf32, #tpu.memory_space<vmem>>, vector<1x1x8x256xf32>
    %169 = vector.shape_cast %168 : vector<1x1x8x256xf32> to vector<8x256xf32>
    %170 = vector.broadcast %64 : f32 to vector<8x256xf32>
    %171 = arith.mulf %170, %169 : vector<8x256xf32>
    %172 = arith.addf %146, %171 : vector<8x256xf32>
    %173 = vector.broadcast %65 : f32 to vector<8x256xf32>
    %174 = arith.mulf %173, %169 : vector<8x256xf32>
    %175 = arith.addf %149, %174 : vector<8x256xf32>
    %176 = vector.broadcast %66 : f32 to vector<8x256xf32>
    %177 = arith.mulf %176, %169 : vector<8x256xf32>
    %178 = arith.addf %152, %177 : vector<8x256xf32>
    %179 = vector.broadcast %67 : f32 to vector<8x256xf32>
    %180 = arith.mulf %179, %169 : vector<8x256xf32>
    %181 = arith.addf %155, %180 : vector<8x256xf32>
    %182 = vector.broadcast %68 : f32 to vector<8x256xf32>
    %183 = arith.mulf %182, %169 : vector<8x256xf32>
    %184 = arith.addf %158, %183 : vector<8x256xf32>
    %185 = vector.broadcast %69 : f32 to vector<8x256xf32>
    %186 = arith.mulf %185, %169 : vector<8x256xf32>
    %187 = arith.addf %161, %186 : vector<8x256xf32>
    %188 = vector.broadcast %70 : f32 to vector<8x256xf32>
    %189 = arith.mulf %188, %169 : vector<8x256xf32>
    %190 = arith.addf %164, %189 : vector<8x256xf32>
    %191 = vector.broadcast %71 : f32 to vector<8x256xf32>
    %192 = arith.mulf %191, %169 : vector<8x256xf32>
    %193 = arith.addf %167, %192 : vector<8x256xf32>
    %c0_21 = arith.constant 0 : index
    %c1_22 = arith.constant 1 : index
    %c0_23 = arith.constant 0 : index
    %c0_24 = arith.constant 0 : index
    %194 = vector.load %arg2[%c0_21, %c1_22, %c0_23, %c0_24] : memref<1x4x8x256xf32, #tpu.memory_space<vmem>>, vector<1x1x6x256xf32>
    %195 = vector.shape_cast %194 : vector<1x1x6x256xf32> to vector<6x256xf32>
    %cst_25 = arith.constant 0.000000e+00 : f32
    %196 = vector.broadcast %cst_25 : f32 to vector<2x256xf32>
    %197 = tpu.concatenate %196, %195 in 0 : vector<2x256xf32>, vector<6x256xf32> -> vector<8x256xf32>
    %198 = vector.broadcast %8 : f32 to vector<8x256xf32>
    %199 = arith.mulf %198, %197 : vector<8x256xf32>
    %200 = arith.addf %172, %199 : vector<8x256xf32>
    %201 = vector.broadcast %9 : f32 to vector<8x256xf32>
    %202 = arith.mulf %201, %197 : vector<8x256xf32>
    %203 = arith.addf %175, %202 : vector<8x256xf32>
    %204 = vector.broadcast %10 : f32 to vector<8x256xf32>
    %205 = arith.mulf %204, %197 : vector<8x256xf32>
    %206 = arith.addf %178, %205 : vector<8x256xf32>
    %207 = vector.broadcast %11 : f32 to vector<8x256xf32>
    %208 = arith.mulf %207, %197 : vector<8x256xf32>
    %209 = arith.addf %181, %208 : vector<8x256xf32>
    %210 = vector.broadcast %12 : f32 to vector<8x256xf32>
    %211 = arith.mulf %210, %197 : vector<8x256xf32>
    %212 = arith.addf %184, %211 : vector<8x256xf32>
    %213 = vector.broadcast %13 : f32 to vector<8x256xf32>
    %214 = arith.mulf %213, %197 : vector<8x256xf32>
    %215 = arith.addf %187, %214 : vector<8x256xf32>
    %216 = vector.broadcast %14 : f32 to vector<8x256xf32>
    %217 = arith.mulf %216, %197 : vector<8x256xf32>
    %218 = arith.addf %190, %217 : vector<8x256xf32>
    %219 = vector.broadcast %15 : f32 to vector<8x256xf32>
    %220 = arith.mulf %219, %197 : vector<8x256xf32>
    %221 = arith.addf %193, %220 : vector<8x256xf32>
    %c0_26 = arith.constant 0 : index
    %c1_27 = arith.constant 1 : index
    %c0_28 = arith.constant 0 : index
    %c0_29 = arith.constant 0 : index
    %222 = vector.load %arg2[%c0_26, %c1_27, %c0_28, %c0_29] : memref<1x4x8x256xf32, #tpu.memory_space<vmem>>, vector<1x1x7x256xf32>
    %223 = vector.shape_cast %222 : vector<1x1x7x256xf32> to vector<7x256xf32>
    %cst_30 = arith.constant 0.000000e+00 : f32
    %224 = vector.broadcast %cst_30 : f32 to vector<1x256xf32>
    %225 = tpu.concatenate %224, %223 in 0 : vector<1x256xf32>, vector<7x256xf32> -> vector<8x256xf32>
    %226 = vector.broadcast %40 : f32 to vector<8x256xf32>
    %227 = arith.mulf %226, %225 : vector<8x256xf32>
    %228 = arith.addf %200, %227 : vector<8x256xf32>
    %229 = vector.broadcast %41 : f32 to vector<8x256xf32>
    %230 = arith.mulf %229, %225 : vector<8x256xf32>
    %231 = arith.addf %203, %230 : vector<8x256xf32>
    %232 = vector.broadcast %42 : f32 to vector<8x256xf32>
    %233 = arith.mulf %232, %225 : vector<8x256xf32>
    %234 = arith.addf %206, %233 : vector<8x256xf32>
    %235 = vector.broadcast %43 : f32 to vector<8x256xf32>
    %236 = arith.mulf %235, %225 : vector<8x256xf32>
    %237 = arith.addf %209, %236 : vector<8x256xf32>
    %238 = vector.broadcast %44 : f32 to vector<8x256xf32>
    %239 = arith.mulf %238, %225 : vector<8x256xf32>
    %240 = arith.addf %212, %239 : vector<8x256xf32>
    %241 = vector.broadcast %45 : f32 to vector<8x256xf32>
    %242 = arith.mulf %241, %225 : vector<8x256xf32>
    %243 = arith.addf %215, %242 : vector<8x256xf32>
    %244 = vector.broadcast %46 : f32 to vector<8x256xf32>
    %245 = arith.mulf %244, %225 : vector<8x256xf32>
    %246 = arith.addf %218, %245 : vector<8x256xf32>
    %247 = vector.broadcast %47 : f32 to vector<8x256xf32>
    %248 = arith.mulf %247, %225 : vector<8x256xf32>
    %249 = arith.addf %221, %248 : vector<8x256xf32>
    %c0_31 = arith.constant 0 : index
    %c1_32 = arith.constant 1 : index
    %c0_33 = arith.constant 0 : index
    %c0_34 = arith.constant 0 : index
    %250 = vector.load %arg2[%c0_31, %c1_32, %c0_33, %c0_34] : memref<1x4x8x256xf32, #tpu.memory_space<vmem>>, vector<1x1x8x256xf32>
    %251 = vector.shape_cast %250 : vector<1x1x8x256xf32> to vector<8x256xf32>
    %252 = vector.broadcast %72 : f32 to vector<8x256xf32>
    %253 = arith.mulf %252, %251 : vector<8x256xf32>
    %254 = arith.addf %228, %253 : vector<8x256xf32>
    %255 = vector.broadcast %73 : f32 to vector<8x256xf32>
    %256 = arith.mulf %255, %251 : vector<8x256xf32>
    %257 = arith.addf %231, %256 : vector<8x256xf32>
    %258 = vector.broadcast %74 : f32 to vector<8x256xf32>
    %259 = arith.mulf %258, %251 : vector<8x256xf32>
    %260 = arith.addf %234, %259 : vector<8x256xf32>
    %261 = vector.broadcast %75 : f32 to vector<8x256xf32>
    %262 = arith.mulf %261, %251 : vector<8x256xf32>
    %263 = arith.addf %237, %262 : vector<8x256xf32>
    %264 = vector.broadcast %76 : f32 to vector<8x256xf32>
    %265 = arith.mulf %264, %251 : vector<8x256xf32>
    %266 = arith.addf %240, %265 : vector<8x256xf32>
    %267 = vector.broadcast %77 : f32 to vector<8x256xf32>
    %268 = arith.mulf %267, %251 : vector<8x256xf32>
    %269 = arith.addf %243, %268 : vector<8x256xf32>
    %270 = vector.broadcast %78 : f32 to vector<8x256xf32>
    %271 = arith.mulf %270, %251 : vector<8x256xf32>
    %272 = arith.addf %246, %271 : vector<8x256xf32>
    %273 = vector.broadcast %79 : f32 to vector<8x256xf32>
    %274 = arith.mulf %273, %251 : vector<8x256xf32>
    %275 = arith.addf %249, %274 : vector<8x256xf32>
    %c0_35 = arith.constant 0 : index
    %c2_36 = arith.constant 2 : index
    %c0_37 = arith.constant 0 : index
    %c0_38 = arith.constant 0 : index
    %276 = vector.load %arg2[%c0_35, %c2_36, %c0_37, %c0_38] : memref<1x4x8x256xf32, #tpu.memory_space<vmem>>, vector<1x1x6x256xf32>
    %277 = vector.shape_cast %276 : vector<1x1x6x256xf32> to vector<6x256xf32>
    %cst_39 = arith.constant 0.000000e+00 : f32
    %278 = vector.broadcast %cst_39 : f32 to vector<2x256xf32>
    %279 = tpu.concatenate %278, %277 in 0 : vector<2x256xf32>, vector<6x256xf32> -> vector<8x256xf32>
    %280 = vector.broadcast %16 : f32 to vector<8x256xf32>
    %281 = arith.mulf %280, %279 : vector<8x256xf32>
    %282 = arith.addf %254, %281 : vector<8x256xf32>
    %283 = vector.broadcast %17 : f32 to vector<8x256xf32>
    %284 = arith.mulf %283, %279 : vector<8x256xf32>
    %285 = arith.addf %257, %284 : vector<8x256xf32>
    %286 = vector.broadcast %18 : f32 to vector<8x256xf32>
    %287 = arith.mulf %286, %279 : vector<8x256xf32>
    %288 = arith.addf %260, %287 : vector<8x256xf32>
    %289 = vector.broadcast %19 : f32 to vector<8x256xf32>
    %290 = arith.mulf %289, %279 : vector<8x256xf32>
    %291 = arith.addf %263, %290 : vector<8x256xf32>
    %292 = vector.broadcast %20 : f32 to vector<8x256xf32>
    %293 = arith.mulf %292, %279 : vector<8x256xf32>
    %294 = arith.addf %266, %293 : vector<8x256xf32>
    %295 = vector.broadcast %21 : f32 to vector<8x256xf32>
    %296 = arith.mulf %295, %279 : vector<8x256xf32>
    %297 = arith.addf %269, %296 : vector<8x256xf32>
    %298 = vector.broadcast %22 : f32 to vector<8x256xf32>
    %299 = arith.mulf %298, %279 : vector<8x256xf32>
    %300 = arith.addf %272, %299 : vector<8x256xf32>
    %301 = vector.broadcast %23 : f32 to vector<8x256xf32>
    %302 = arith.mulf %301, %279 : vector<8x256xf32>
    %303 = arith.addf %275, %302 : vector<8x256xf32>
    %c0_40 = arith.constant 0 : index
    %c2_41 = arith.constant 2 : index
    %c0_42 = arith.constant 0 : index
    %c0_43 = arith.constant 0 : index
    %304 = vector.load %arg2[%c0_40, %c2_41, %c0_42, %c0_43] : memref<1x4x8x256xf32, #tpu.memory_space<vmem>>, vector<1x1x7x256xf32>
    %305 = vector.shape_cast %304 : vector<1x1x7x256xf32> to vector<7x256xf32>
    %cst_44 = arith.constant 0.000000e+00 : f32
    %306 = vector.broadcast %cst_44 : f32 to vector<1x256xf32>
    %307 = tpu.concatenate %306, %305 in 0 : vector<1x256xf32>, vector<7x256xf32> -> vector<8x256xf32>
    %308 = vector.broadcast %48 : f32 to vector<8x256xf32>
    %309 = arith.mulf %308, %307 : vector<8x256xf32>
    %310 = arith.addf %282, %309 : vector<8x256xf32>
    %311 = vector.broadcast %49 : f32 to vector<8x256xf32>
    %312 = arith.mulf %311, %307 : vector<8x256xf32>
    %313 = arith.addf %285, %312 : vector<8x256xf32>
    %314 = vector.broadcast %50 : f32 to vector<8x256xf32>
    %315 = arith.mulf %314, %307 : vector<8x256xf32>
    %316 = arith.addf %288, %315 : vector<8x256xf32>
    %317 = vector.broadcast %51 : f32 to vector<8x256xf32>
    %318 = arith.mulf %317, %307 : vector<8x256xf32>
    %319 = arith.addf %291, %318 : vector<8x256xf32>
    %320 = vector.broadcast %52 : f32 to vector<8x256xf32>
    %321 = arith.mulf %320, %307 : vector<8x256xf32>
    %322 = arith.addf %294, %321 : vector<8x256xf32>
    %323 = vector.broadcast %53 : f32 to vector<8x256xf32>
    %324 = arith.mulf %323, %307 : vector<8x256xf32>
    %325 = arith.addf %297, %324 : vector<8x256xf32>
    %326 = vector.broadcast %54 : f32 to vector<8x256xf32>
    %327 = arith.mulf %326, %307 : vector<8x256xf32>
    %328 = arith.addf %300, %327 : vector<8x256xf32>
    %329 = vector.broadcast %55 : f32 to vector<8x256xf32>
    %330 = arith.mulf %329, %307 : vector<8x256xf32>
    %331 = arith.addf %303, %330 : vector<8x256xf32>
    %c0_45 = arith.constant 0 : index
    %c2_46 = arith.constant 2 : index
    %c0_47 = arith.constant 0 : index
    %c0_48 = arith.constant 0 : index
    %332 = vector.load %arg2[%c0_45, %c2_46, %c0_47, %c0_48] : memref<1x4x8x256xf32, #tpu.memory_space<vmem>>, vector<1x1x8x256xf32>
    %333 = vector.shape_cast %332 : vector<1x1x8x256xf32> to vector<8x256xf32>
    %334 = vector.broadcast %80 : f32 to vector<8x256xf32>
    %335 = arith.mulf %334, %333 : vector<8x256xf32>
    %336 = arith.addf %310, %335 : vector<8x256xf32>
    %337 = vector.broadcast %81 : f32 to vector<8x256xf32>
    %338 = arith.mulf %337, %333 : vector<8x256xf32>
    %339 = arith.addf %313, %338 : vector<8x256xf32>
    %340 = vector.broadcast %82 : f32 to vector<8x256xf32>
    %341 = arith.mulf %340, %333 : vector<8x256xf32>
    %342 = arith.addf %316, %341 : vector<8x256xf32>
    %343 = vector.broadcast %83 : f32 to vector<8x256xf32>
    %344 = arith.mulf %343, %333 : vector<8x256xf32>
    %345 = arith.addf %319, %344 : vector<8x256xf32>
    %346 = vector.broadcast %84 : f32 to vector<8x256xf32>
    %347 = arith.mulf %346, %333 : vector<8x256xf32>
    %348 = arith.addf %322, %347 : vector<8x256xf32>
    %349 = vector.broadcast %85 : f32 to vector<8x256xf32>
    %350 = arith.mulf %349, %333 : vector<8x256xf32>
    %351 = arith.addf %325, %350 : vector<8x256xf32>
    %352 = vector.broadcast %86 : f32 to vector<8x256xf32>
    %353 = arith.mulf %352, %333 : vector<8x256xf32>
    %354 = arith.addf %328, %353 : vector<8x256xf32>
    %355 = vector.broadcast %87 : f32 to vector<8x256xf32>
    %356 = arith.mulf %355, %333 : vector<8x256xf32>
    %357 = arith.addf %331, %356 : vector<8x256xf32>
    %c0_49 = arith.constant 0 : index
    %c3_50 = arith.constant 3 : index
    %c0_51 = arith.constant 0 : index
    %c0_52 = arith.constant 0 : index
    %358 = vector.load %arg2[%c0_49, %c3_50, %c0_51, %c0_52] : memref<1x4x8x256xf32, #tpu.memory_space<vmem>>, vector<1x1x6x256xf32>
    %359 = vector.shape_cast %358 : vector<1x1x6x256xf32> to vector<6x256xf32>
    %cst_53 = arith.constant 0.000000e+00 : f32
    %360 = vector.broadcast %cst_53 : f32 to vector<2x256xf32>
    %361 = tpu.concatenate %360, %359 in 0 : vector<2x256xf32>, vector<6x256xf32> -> vector<8x256xf32>
    %362 = vector.broadcast %24 : f32 to vector<8x256xf32>
    %363 = arith.mulf %362, %361 : vector<8x256xf32>
    %364 = arith.addf %336, %363 : vector<8x256xf32>
    %365 = vector.broadcast %25 : f32 to vector<8x256xf32>
    %366 = arith.mulf %365, %361 : vector<8x256xf32>
    %367 = arith.addf %339, %366 : vector<8x256xf32>
    %368 = vector.broadcast %26 : f32 to vector<8x256xf32>
    %369 = arith.mulf %368, %361 : vector<8x256xf32>
    %370 = arith.addf %342, %369 : vector<8x256xf32>
    %371 = vector.broadcast %27 : f32 to vector<8x256xf32>
    %372 = arith.mulf %371, %361 : vector<8x256xf32>
    %373 = arith.addf %345, %372 : vector<8x256xf32>
    %374 = vector.broadcast %28 : f32 to vector<8x256xf32>
    %375 = arith.mulf %374, %361 : vector<8x256xf32>
    %376 = arith.addf %348, %375 : vector<8x256xf32>
    %377 = vector.broadcast %29 : f32 to vector<8x256xf32>
    %378 = arith.mulf %377, %361 : vector<8x256xf32>
    %379 = arith.addf %351, %378 : vector<8x256xf32>
    %380 = vector.broadcast %30 : f32 to vector<8x256xf32>
    %381 = arith.mulf %380, %361 : vector<8x256xf32>
    %382 = arith.addf %354, %381 : vector<8x256xf32>
    %383 = vector.broadcast %31 : f32 to vector<8x256xf32>
    %384 = arith.mulf %383, %361 : vector<8x256xf32>
    %385 = arith.addf %357, %384 : vector<8x256xf32>
    %c0_54 = arith.constant 0 : index
    %c3_55 = arith.constant 3 : index
    %c0_56 = arith.constant 0 : index
    %c0_57 = arith.constant 0 : index
    %386 = vector.load %arg2[%c0_54, %c3_55, %c0_56, %c0_57] : memref<1x4x8x256xf32, #tpu.memory_space<vmem>>, vector<1x1x7x256xf32>
    %387 = vector.shape_cast %386 : vector<1x1x7x256xf32> to vector<7x256xf32>
    %cst_58 = arith.constant 0.000000e+00 : f32
    %388 = vector.broadcast %cst_58 : f32 to vector<1x256xf32>
    %389 = tpu.concatenate %388, %387 in 0 : vector<1x256xf32>, vector<7x256xf32> -> vector<8x256xf32>
    %390 = vector.broadcast %56 : f32 to vector<8x256xf32>
    %391 = arith.mulf %390, %389 : vector<8x256xf32>
    %392 = arith.addf %364, %391 : vector<8x256xf32>
    %393 = vector.broadcast %57 : f32 to vector<8x256xf32>
    %394 = arith.mulf %393, %389 : vector<8x256xf32>
    %395 = arith.addf %367, %394 : vector<8x256xf32>
    %396 = vector.broadcast %58 : f32 to vector<8x256xf32>
    %397 = arith.mulf %396, %389 : vector<8x256xf32>
    %398 = arith.addf %370, %397 : vector<8x256xf32>
    %399 = vector.broadcast %59 : f32 to vector<8x256xf32>
    %400 = arith.mulf %399, %389 : vector<8x256xf32>
    %401 = arith.addf %373, %400 : vector<8x256xf32>
    %402 = vector.broadcast %60 : f32 to vector<8x256xf32>
    %403 = arith.mulf %402, %389 : vector<8x256xf32>
    %404 = arith.addf %376, %403 : vector<8x256xf32>
    %405 = vector.broadcast %61 : f32 to vector<8x256xf32>
    %406 = arith.mulf %405, %389 : vector<8x256xf32>
    %407 = arith.addf %379, %406 : vector<8x256xf32>
    %408 = vector.broadcast %62 : f32 to vector<8x256xf32>
    %409 = arith.mulf %408, %389 : vector<8x256xf32>
    %410 = arith.addf %382, %409 : vector<8x256xf32>
    %411 = vector.broadcast %63 : f32 to vector<8x256xf32>
    %412 = arith.mulf %411, %389 : vector<8x256xf32>
    %413 = arith.addf %385, %412 : vector<8x256xf32>
    %c0_59 = arith.constant 0 : index
    %c3_60 = arith.constant 3 : index
    %c0_61 = arith.constant 0 : index
    %c0_62 = arith.constant 0 : index
    %414 = vector.load %arg2[%c0_59, %c3_60, %c0_61, %c0_62] : memref<1x4x8x256xf32, #tpu.memory_space<vmem>>, vector<1x1x8x256xf32>
    %415 = vector.shape_cast %414 : vector<1x1x8x256xf32> to vector<8x256xf32>
    %416 = vector.broadcast %88 : f32 to vector<8x256xf32>
    %417 = arith.mulf %416, %415 : vector<8x256xf32>
    %418 = arith.addf %392, %417 : vector<8x256xf32>
    %419 = vector.broadcast %89 : f32 to vector<8x256xf32>
    %420 = arith.mulf %419, %415 : vector<8x256xf32>
    %421 = arith.addf %395, %420 : vector<8x256xf32>
    %422 = vector.broadcast %90 : f32 to vector<8x256xf32>
    %423 = arith.mulf %422, %415 : vector<8x256xf32>
    %424 = arith.addf %398, %423 : vector<8x256xf32>
    %425 = vector.broadcast %91 : f32 to vector<8x256xf32>
    %426 = arith.mulf %425, %415 : vector<8x256xf32>
    %427 = arith.addf %401, %426 : vector<8x256xf32>
    %428 = vector.broadcast %92 : f32 to vector<8x256xf32>
    %429 = arith.mulf %428, %415 : vector<8x256xf32>
    %430 = arith.addf %404, %429 : vector<8x256xf32>
    %431 = vector.broadcast %93 : f32 to vector<8x256xf32>
    %432 = arith.mulf %431, %415 : vector<8x256xf32>
    %433 = arith.addf %407, %432 : vector<8x256xf32>
    %434 = vector.broadcast %94 : f32 to vector<8x256xf32>
    %435 = arith.mulf %434, %415 : vector<8x256xf32>
    %436 = arith.addf %410, %435 : vector<8x256xf32>
    %437 = vector.broadcast %95 : f32 to vector<8x256xf32>
    %438 = arith.mulf %437, %415 : vector<8x256xf32>
    %439 = arith.addf %413, %438 : vector<8x256xf32>
    %c0_63 = arith.constant 0 : index
    %c0_64 = arith.constant 0 : index
    %c0_65 = arith.constant 0 : index
    %c0_66 = arith.constant 0 : index
    %440 = vector.load %arg5[%c0_63, %c0_64, %c0_65, %c0_66] : memref<1x8x8x256xf32, #tpu.memory_space<vmem>>, vector<1x1x8x256xf32>
    %441 = vector.shape_cast %440 : vector<1x1x8x256xf32> to vector<8x256xf32>
    %442 = vector.shape_cast %418 : vector<8x256xf32> to vector<1x1x8x256xf32>
    tpu.vector_store %arg5[%c0_63, %c0_64, %c0_65, %c0_66], %442 {strides = array<i32>} : memref<1x8x8x256xf32, #tpu.memory_space<vmem>>, vector<1x1x8x256xf32>,
    %c0_67 = arith.constant 0 : index
    %c1_68 = arith.constant 1 : index
    %c0_69 = arith.constant 0 : index
    %c0_70 = arith.constant 0 : index
    %443 = vector.load %arg5[%c0_67, %c1_68, %c0_69, %c0_70] : memref<1x8x8x256xf32, #tpu.memory_space<vmem>>, vector<1x1x8x256xf32>
    %444 = vector.shape_cast %443 : vector<1x1x8x256xf32> to vector<8x256xf32>
    %445 = vector.shape_cast %421 : vector<8x256xf32> to vector<1x1x8x256xf32>
    tpu.vector_store %arg5[%c0_67, %c1_68, %c0_69, %c0_70], %445 {strides = array<i32>} : memref<1x8x8x256xf32, #tpu.memory_space<vmem>>, vector<1x1x8x256xf32>,
    %c0_71 = arith.constant 0 : index
    %c2_72 = arith.constant 2 : index
    %c0_73 = arith.constant 0 : index
    %c0_74 = arith.constant 0 : index
    %446 = vector.load %arg5[%c0_71, %c2_72, %c0_73, %c0_74] : memref<1x8x8x256xf32, #tpu.memory_space<vmem>>, vector<1x1x8x256xf32>
    %447 = vector.shape_cast %446 : vector<1x1x8x256xf32> to vector<8x256xf32>
    %448 = vector.shape_cast %424 : vector<8x256xf32> to vector<1x1x8x256xf32>
    tpu.vector_store %arg5[%c0_71, %c2_72, %c0_73, %c0_74], %448 {strides = array<i32>} : memref<1x8x8x256xf32, #tpu.memory_space<vmem>>, vector<1x1x8x256xf32>,
    %c0_75 = arith.constant 0 : index
    %c3_76 = arith.constant 3 : index
    %c0_77 = arith.constant 0 : index
    %c0_78 = arith.constant 0 : index
    %449 = vector.load %arg5[%c0_75, %c3_76, %c0_77, %c0_78] : memref<1x8x8x256xf32, #tpu.memory_space<vmem>>, vector<1x1x8x256xf32>
    %450 = vector.shape_cast %449 : vector<1x1x8x256xf32> to vector<8x256xf32>
    %451 = vector.shape_cast %427 : vector<8x256xf32> to vector<1x1x8x256xf32>
    tpu.vector_store %arg5[%c0_75, %c3_76, %c0_77, %c0_78], %451 {strides = array<i32>} : memref<1x8x8x256xf32, #tpu.memory_space<vmem>>, vector<1x1x8x256xf32>,
    %c0_79 = arith.constant 0 : index
    %c4_80 = arith.constant 4 : index
    %c0_81 = arith.constant 0 : index
    %c0_82 = arith.constant 0 : index
    %452 = vector.load %arg5[%c0_79, %c4_80, %c0_81, %c0_82] : memref<1x8x8x256xf32, #tpu.memory_space<vmem>>, vector<1x1x8x256xf32>
    %453 = vector.shape_cast %452 : vector<1x1x8x256xf32> to vector<8x256xf32>
    %454 = vector.shape_cast %430 : vector<8x256xf32> to vector<1x1x8x256xf32>
    tpu.vector_store %arg5[%c0_79, %c4_80, %c0_81, %c0_82], %454 {strides = array<i32>} : memref<1x8x8x256xf32, #tpu.memory_space<vmem>>, vector<1x1x8x256xf32>,
    %c0_83 = arith.constant 0 : index
    %c5_84 = arith.constant 5 : index
    %c0_85 = arith.constant 0 : index
    %c0_86 = arith.constant 0 : index
    %455 = vector.load %arg5[%c0_83, %c5_84, %c0_85, %c0_86] : memref<1x8x8x256xf32, #tpu.memory_space<vmem>>, vector<1x1x8x256xf32>
    %456 = vector.shape_cast %455 : vector<1x1x8x256xf32> to vector<8x256xf32>
    %457 = vector.shape_cast %433 : vector<8x256xf32> to vector<1x1x8x256xf32>
    tpu.vector_store %arg5[%c0_83, %c5_84, %c0_85, %c0_86], %457 {strides = array<i32>} : memref<1x8x8x256xf32, #tpu.memory_space<vmem>>, vector<1x1x8x256xf32>,
    %c0_87 = arith.constant 0 : index
    %c6_88 = arith.constant 6 : index
    %c0_89 = arith.constant 0 : index
    %c0_90 = arith.constant 0 : index
    %458 = vector.load %arg5[%c0_87, %c6_88, %c0_89, %c0_90] : memref<1x8x8x256xf32, #tpu.memory_space<vmem>>, vector<1x1x8x256xf32>
    %459 = vector.shape_cast %458 : vector<1x1x8x256xf32> to vector<8x256xf32>
    %460 = vector.shape_cast %436 : vector<8x256xf32> to vector<1x1x8x256xf32>
    tpu.vector_store %arg5[%c0_87, %c6_88, %c0_89, %c0_90], %460 {strides = array<i32>} : memref<1x8x8x256xf32, #tpu.memory_space<vmem>>, vector<1x1x8x256xf32>,
    %c0_91 = arith.constant 0 : index
    %c7_92 = arith.constant 7 : index
    %c0_93 = arith.constant 0 : index
    %c0_94 = arith.constant 0 : index
    %461 = vector.load %arg5[%c0_91, %c7_92, %c0_93, %c0_94] : memref<1x8x8x256xf32, #tpu.memory_space<vmem>>, vector<1x1x8x256xf32>
    %462 = vector.shape_cast %461 : vector<1x1x8x256xf32> to vector<8x256xf32>
    %463 = vector.shape_cast %439 : vector<8x256xf32> to vector<1x1x8x256xf32>
    tpu.vector_store %arg5[%c0_91, %c7_92, %c0_93, %c0_94], %463 {strides = array<i32>} : memref<1x8x8x256xf32, #tpu.memory_space<vmem>>, vector<1x1x8x256xf32>,
    return
  }
  func.func @transform_0(%arg0: i32, %arg1: i32) -> (i32, i32, i32, i32) {
    %c0_i32 = arith.constant 0 : i32
    %c0_i32_0 = arith.constant 0 : i32
    %c0_i32_1 = arith.constant 0 : i32
    return %arg0, %c0_i32, %c0_i32_0, %arg1 : i32, i32, i32, i32
  }
  func.func @transform_1(%arg0: i32, %arg1: i32) -> i32 {
    %c0_i32 = arith.constant 0 : i32
    %c0_i32_0 = arith.constant 0 : i32
    return %c0_i32 : i32
  }
  func.func @transform_2(%arg0: i32, %arg1: i32) -> i32 {
    %c0_i32 = arith.constant 0 : i32
    %c0_i32_0 = arith.constant 0 : i32
    return %c0_i32 : i32
  }
  func.func @transform_3(%arg0: i32, %arg1: i32) -> (i32, i32, i32, i32) {
    %c0_i32 = arith.constant 0 : i32
    %c0_i32_0 = arith.constant 0 : i32
    %c0_i32_1 = arith.constant 0 : i32
    return %arg0, %c0_i32, %c0_i32_0, %arg1 : i32, i32, i32, i32
  }
}

</mosaic_0001>

<llo_original>
// kernel: tpu_custom_call.1
$region0: #{tpu_custom_call.1}
  #allocation0 [shape = 'u32[]', space=smem, size = 0x4, offset = 0x4, fixed_abs, tag = 'smem constant byte address 0x4 - core index']
  #allocation1 [shape = 'u32[144,128]{1,0:T(1,128)}', space=vmem, size = 0x12000, scoped, tag = 'internal scratch']
  %s0 = inlined_call_operand.hbm [shape: f32[2,4,8,256], index: 0, kind: input, shape index: {}]
  %s1 = inlined_call_operand.vmem [shape: f32[96], index: 1, kind: input, shape index: {}]
  %s2 = inlined_call_operand.vmem [shape: f32[8], index: 2, kind: input, shape index: {}]
  %s3 = inlined_call_operand.hbm [shape: f32[2,8,8,256], index: 3, kind: output, shape index: {}]
  %s4 = sld [smem:[#allocation0]]
  $region57: #{tpu_custom_call.1} parent=0
    _
  %s6 = ssub.s32 1, %s4
  %s7 = scalar_select 0, %s6, %s4
  $region1: #{tpu_custom_call.1} parent=0
    #allocation2 [shape = 'u8[65536]{0}', space=vmem, size = 0x10000, scoped, tag = 'input window, operand 0']
    #allocation3 [shape = 's32[2]{0}', space=sflag, size = 0x8, scoped, tag = 'scoped memory for tpu_custom_call.1']
    #allocation4 [shape = 's32[2]{0}', space=sflag, size = 0x8, scoped, tag = 'scoped memory for tpu_custom_call.1']
    #allocation5 [shape = 's32[2]{0}', space=sflag, size = 0x8, scoped, tag = 'scoped memory for tpu_custom_call.1']
    #allocation6 [shape = 'u8[512]{0}', space=smem, size = 0x200, scoped, tag = 'input window, operand 1, single buffered']
    #allocation7 [shape = 'u8[512]{0}', space=smem, size = 0x200, scoped, tag = 'input window, operand 2, single buffered']
    #allocation8 [shape = 's32[1]{0}', space=sflag, size = 0x4, scoped, tag = 'scoped memory for tpu_custom_call.1']
    #allocation9 [shape = 'u8[131072]{0}', space=vmem, size = 0x20000, scoped, tag = 'output window, operand 0']
    %8 = vsyncpa [#allocation3], 0
    %s9 = scalar_lea.sflag [#allocation3], 1
    %10 = vsyncpa %s9, 0
    %11 = vsyncpa [#allocation5], 0
    %12 = vsyncpa [#allocation8], 0
    %13 = vsyncpa [#allocation4], 0
    %s14 = scalar_lea.sflag [#allocation4], 1
    %15 = vsyncpa %s14, 0
    loop: start=0, step=1, limit=4
    $region2: #{tpu_custom_call.1} parent=1 // loop_pre_header
      _
    $region3: #{tpu_custom_call.1} parent=1 // loop_header
      %s17 = sphi 0, %s21
      %p18 = scmp.ge.s32.totalorder %s17, 4
      %s24 = sphi 0, %s36
      %s25 = sphi 0, %s32
      %s26 = sphi 0, %s24
      %s27 = sphi 0, %s25
      %s28 = sphi 0, %s26
      %s29 = sphi 0, %s27
      %s41 = sphi 0, %s43
      %s44 = sphi 0, %s41
      %s45 = sphi 0, %s44
      %s61 = sphi 0, %s45
      %s65 = sphi 0, %s65
      %s67 = sphi 0, %s65
      %s68 = sphi 0, %s67
      %s82 = sphi 0, %s68
      %s86 = sphi 0, %s86
      %s88 = sphi 0, %s86
      %s89 = sphi 0, %s88
      %s103 = sphi 0, %s89
      %s111 = sphi 0, %s113
      %s114 = sphi 0, %s111
      %s115 = sphi 0, %s114
      %s131 = sphi 0, %s115
    $region4: #{tpu_custom_call.1} parent=1 // loop_header_branch
      %20 = sbr.rel (%p18) target = $region8
    $region5: #{tpu_custom_call.1} parent=1 // loop_body
      %s22 = ssub.s32 %s17, 1
      %s23 = ssub.s32 %s17, 2
      %s30 = sadd.s32 1, %s25
      %p31 = scmp.ge.s32.totalorder %s30, 1
      %s32 = scalar_select %p31, 0, %s30
      %s33 = sadd.s32 1, %s24
      %s34 = scalar_select %p31, %s33, %s24
      %p35 = scmp.ge.s32.totalorder %s34, 2
      %s36 = scalar_select %p35, 0, %s34
      %s37 = ssub.s32 %s24, %s36
      %s38 = ssub.s32 %s25, %s32
      %s39 = sor.u32 %s37, %s38
      %p40 = scmp.eq.s32.totalorder %s39, 0
      %s42 = sadd.s32 %s41, 1
      %s43 = scalar_select %p40, %s41, %s42
      %p46 = pneg %p40
      %p47 = scmp.eq.s32.totalorder %s17, 1
      %p48 = por %p46, %p47
      %p49 = scmp.ne.s32.totalorder %s41, %s44
      %p50 = scmp.eq.s32.totalorder %s17, 0
      %p51 = por %p49, %p50
      %p52 = scmp.ne.s32.totalorder %s41, %s44
      %p53 = scmp.eq.s32.totalorder %s22, 1
      %p54 = por %p52, %p53
      %p55 = scmp.ne.s32.totalorder %s44, %s45
      %p56 = scmp.eq.s32.totalorder %s22, 0
      %p57 = por %p55, %p56
      %p58 = scmp.ne.s32.totalorder %s44, %s45
      %p59 = scmp.eq.s32.totalorder %s23, 1
      %p60 = por %p58, %p59
      %p62 = scmp.ne.s32.totalorder %s45, %s61
      %p63 = scmp.eq.s32.totalorder %s23, 0
      %p64 = por %p62, %p63
      %s66 = sadd.s32 %s65, 1
      %p69 = scmp.eq.s32.totalorder %s17, 1
      %p70 = scmp.ne.s32.totalorder %s65, %s67
      %p71 = scmp.eq.s32.totalorder %s17, 0
      %p72 = por %p70, %p71
      %p73 = scmp.ne.s32.totalorder %s65, %s67
      %p74 = scmp.eq.s32.totalorder %s22, 1
      %p75 = por %p73, %p74
      %p76 = scmp.ne.s32.totalorder %s67, %s68
      %p77 = scmp.eq.s32.totalorder %s22, 0
      %p78 = por %p76, %p77
      %p79 = scmp.ne.s32.totalorder %s67, %s68
      %p80 = scmp.eq.s32.totalorder %s23, 1
      %p81 = por %p79, %p80
      %p83 = scmp.ne.s32.totalorder %s68, %s82
      %p84 = scmp.eq.s32.totalorder %s23, 0
      %p85 = por %p83, %p84
      %s87 = sadd.s32 %s86, 1
      %p90 = scmp.eq.s32.totalorder %s17, 1
      %p91 = scmp.ne.s32.totalorder %s86, %s88
      %p92 = scmp.eq.s32.totalorder %s17, 0
      %p93 = por %p91, %p92
      %p94 = scmp.ne.s32.totalorder %s86, %s88
      %p95 = scmp.eq.s32.totalorder %s22, 1
      %p96 = por %p94, %p95
      %p97 = scmp.ne.s32.totalorder %s88, %s89
      %p98 = scmp.eq.s32.totalorder %s22, 0
      %p99 = por %p97, %p98
      %p100 = scmp.ne.s32.totalorder %s88, %s89
      %p101 = scmp.eq.s32.totalorder %s23, 1
      %p102 = por %p100, %p101
      %p104 = scmp.ne.s32.totalorder %s89, %s103
      %p105 = scmp.eq.s32.totalorder %s23, 0
      %p106 = por %p104, %p105
      %s107 = ssub.s32 %s24, %s36
      %s108 = ssub.s32 %s25, %s32
      %s109 = sor.u32 %s107, %s108
      %p110 = scmp.eq.s32.totalorder %s109, 0
      %s112 = sadd.s32 %s111, 1
      %s113 = scalar_select %p110, %s111, %s112
      %p116 = pneg %p110
      %p117 = scmp.eq.s32.totalorder %s17, 1
      %p118 = por %p116, %p117
      %p119 = scmp.ne.s32.totalorder %s111, %s114
      %p120 = scmp.eq.s32.totalorder %s17, 0
      %p121 = por %p119, %p120
      %p122 = scmp.ne.s32.totalorder %s111, %s114
      %p123 = scmp.eq.s32.totalorder %s22, 1
      %p124 = por %p122, %p123
      %p125 = scmp.ne.s32.totalorder %s114, %s115
      %p126 = scmp.eq.s32.totalorder %s22, 0
      %p127 = por %p125, %p126
      %p128 = scmp.ne.s32.totalorder %s114, %s115
      %p129 = scmp.eq.s32.totalorder %s23, 1
      %p130 = por %p128, %p129
      %p132 = scmp.ne.s32.totalorder %s115, %s131
      %p133 = scmp.eq.s32.totalorder %s23, 0
      %p134 = por %p132, %p133
      %p135 = scmp.le.s32.totalorder 1, %s17
      %p136 = scmp.lt.s32.totalorder %s17, 3
      %p137 = pnand %p135, %p136
      %p138 = pneg %p137
      // Predicated region
      $region9: #{tpu_custom_call.1} parent=5 // pred_check
        _
      $region10: #{tpu_custom_call.1} parent=5 // pred_check_branch
        %140 = sbr.rel (%p137) target = $region12
      $region11: #{tpu_custom_call.1} parent=5 // pred_region
        %s141 = ssub.s32 %s17, 1
        // Predicated region
        $region13: #{tpu_custom_call.1} parent=11 // pred_check
          %p142 = pneg %p78
        $region14: #{tpu_custom_call.1} parent=11 // pred_check_branch
          %144 = sbr.rel (%p142) target = $region16
        $region15: #{tpu_custom_call.1} parent=11 // pred_region
          %s146 = ssub.s32 16, 16
          %147 = vsyncadd [#allocation5], %s146
          %s149 = sshll.u32 %s1, 4
          %s150 = int_to_ptr.vmem [resolvable:$true] %s149
          %152 = dma.vmem_to_smem %s150, 16, [#allocation6], [#allocation5]
        $region16: #{tpu_custom_call.1} parent=11 // pred_fallthru
          _
        // Predicated region
        $region17: #{tpu_custom_call.1} parent=11 // pred_check
          %p153 = pneg %p99
        $region18: #{tpu_custom_call.1} parent=11 // pred_check_branch
          %155 = sbr.rel (%p153) target = $region20
        $region19: #{tpu_custom_call.1} parent=11 // pred_region
          %s157 = ssub.s32 16, 16
          %158 = vsyncadd [#allocation8], %s157
          %s160 = sshll.u32 %s2, 4
          %s161 = int_to_ptr.vmem [resolvable:$true] %s160
          %163 = dma.vmem_to_smem %s161, 16, [#allocation7], [#allocation8]
        $region20: #{tpu_custom_call.1} parent=11 // pred_fallthru
          _
      $region12: #{tpu_custom_call.1} parent=5 // pred_fallthru
        _
      %p164 = scmp.lt.s32.totalorder %s17, 2
      // Predicated region
      $region21: #{tpu_custom_call.1} parent=5 // pred_check
        %p165 = pneg %p164
      $region22: #{tpu_custom_call.1} parent=5 // pred_check_branch
        %167 = sbr.rel (%p165) target = $region24
      $region23: #{tpu_custom_call.1} parent=5 // pred_region
        // Predicated region
        $region25: #{tpu_custom_call.1} parent=23 // pred_check
          %p168 = pneg %p51
        $region26: #{tpu_custom_call.1} parent=23 // pred_check_branch
          %170 = sbr.rel (%p168) target = $region28
        $region27: #{tpu_custom_call.1} parent=23 // pred_region
          %s171 = sand.u32 %s41, 1
          %s172 = scalar_lea.sflag [#allocation3], %s171
          %s173 = sand.u32 %s41, 1
          %s174 = smul.addr %s173, 64
          %s175 = scalar_lea.vmem [#allocation2], %s174
          %s176 = smul.u32 2, %s25
          %s178 = ssub.s32 1024, 1024
          %179 = vsyncadd %s172, %s178
          %s180 = smul.addr %s24, 8
          %s181 = sadd.s32 %s176, %s180
          %s182 = smul.addr %s181, 128
          %s183 = scalar_lea.hbm %s0, %s182
          %s184 = sshll.u32 %s175, 4
          %s185 = int_to_ptr.vmem [resolvable:$true] %s184
          %190 = dma.hbm_to_vmem [thread:$0]  %s183, 1024, %s185, %s172, 256, 256, 16
        $region28: #{tpu_custom_call.1} parent=23 // pred_fallthru
          _
      $region24: #{tpu_custom_call.1} parent=5 // pred_fallthru
        _
      %p191 = scmp.le.s32.totalorder 1, %s17
      %p192 = scmp.lt.s32.totalorder %s17, 3
      %p193 = pnand %p191, %p192
      %p194 = pneg %p193
      // Predicated region
      $region29: #{tpu_custom_call.1} parent=5 // pred_check
        _
      $region30: #{tpu_custom_call.1} parent=5 // pred_check_branch
        %196 = sbr.rel (%p193) target = $region32
      $region31: #{tpu_custom_call.1} parent=5 // pred_region
        %s197 = ssub.s32 %s17, 1
        %s198 = sand.u32 %s44, 1
        %s199 = scalar_lea.sflag [#allocation3], %s198
        %s200 = sand.u32 %s44, 1
        %s201 = smul.addr %s200, 64
        %s202 = scalar_lea.vmem [#allocation2], %s201
        // Predicated region
        $region33: #{tpu_custom_call.1} parent=31 // pred_check
          %p203 = pneg %p57
        $region34: #{tpu_custom_call.1} parent=31 // pred_check_branch
          %205 = sbr.rel (%p203) target = $region36
        $region35: #{tpu_custom_call.1} parent=31 // pred_region
          %206 = dma.done %s199, 1024
        $region36: #{tpu_custom_call.1} parent=31 // pred_fallthru
          _
        // Predicated region
        $region37: #{tpu_custom_call.1} parent=31 // pred_check
          %p207 = pneg %p78
        $region38: #{tpu_custom_call.1} parent=31 // pred_check_branch
          %209 = sbr.rel (%p207) target = $region40
        $region39: #{tpu_custom_call.1} parent=31 // pred_region
          %210 = dma.done [#allocation5], 16
        $region40: #{tpu_custom_call.1} parent=31 // pred_fallthru
          _
        // Predicated region
        $region41: #{tpu_custom_call.1} parent=31 // pred_check
          %p211 = pneg %p99
        $region42: #{tpu_custom_call.1} parent=31 // pred_check_branch
          %213 = sbr.rel (%p211) target = $region44
        $region43: #{tpu_custom_call.1} parent=31 // pred_region
          %214 = dma.done [#allocation8], 16
        $region44: #{tpu_custom_call.1} parent=31 // pred_fallthru
          _
        %215 = sfence
        %s216 = sand.u32 %s44, 1
        %s217 = scalar_lea.sflag [#allocation3], %s216
        %s218 = sand.u32 %s44, 1
        %s219 = smul.addr %s218, 64
        %s220 = scalar_lea.vmem [#allocation2], %s219
        %p221 = pneg %p57
        %p222 = pneg %p54
        %p223 = pneg %p78
        %p224 = pneg %p75
        %p225 = pneg %p99
        %p226 = pneg %p96
        %p227 = pneg %p127
        %p228 = pneg %p124
        %s229 = sand.u32 %s114, 1
        %s230 = scalar_lea.sflag [#allocation4], %s229
        %s231 = sand.u32 %s114, 1
        %s232 = smul.addr %s231, 128
        %s233 = scalar_lea.vmem [#allocation9], %s232
        %s234 = smul.u32 2, %s27
        %s235 = smul.u32 2, %s27
        %s236 = sld [smem:[#allocation6]]
        %s237 = sld [smem:[#allocation6 + $0x4]]
        %s238 = sld [smem:[#allocation6 + $0x8]]
        %s239 = sld [smem:[#allocation6 + $0xc]]
        %s240 = sld [smem:[#allocation6 + $0x10]]
        %s241 = sld [smem:[#allocation6 + $0x14]]
        %s242 = sld [smem:[#allocation6 + $0x18]]
        %s243 = sld [smem:[#allocation6 + $0x1c]]
        %s244 = sld [smem:[#allocation6 + $0x1]]
        %s245 = sld [smem:[#allocation6 + $0x5]]
        %s246 = sld [smem:[#allocation6 + $0x9]]
        %s247 = sld [smem:[#allocation6 + $0xd]]
        %s248 = sld [smem:[#allocation6 + $0x11]]
        %s249 = sld [smem:[#allocation6 + $0x15]]
        %s250 = sld [smem:[#allocation6 + $0x19]]
        %s251 = sld [smem:[#allocation6 + $0x1d]]
        %s252 = sld [smem:[#allocation6 + $0x2]]
        %s253 = sld [smem:[#allocation6 + $0x6]]
        %s254 = sld [smem:[#allocation6 + $0xa]]
        %s255 = sld [smem:[#allocation6 + $0xe]]
        %s256 = sld [smem:[#allocation6 + $0x12]]
        %s257 = sld [smem:[#allocation6 + $0x16]]
        %s258 = sld [smem:[#allocation6 + $0x1a]]
        %s259 = sld [smem:[#allocation6 + $0x1e]]
        %s260 = sld [smem:[#allocation6 + $0x3]]
        %s261 = sld [smem:[#allocation6 + $0x7]]
        %s262 = sld [smem:[#allocation6 + $0xb]]
        %s263 = sld [smem:[#allocation6 + $0xf]]
        %s264 = sld [smem:[#allocation6 + $0x13]]
        %s265 = sld [smem:[#allocation6 + $0x17]]
        %s266 = sld [smem:[#allocation6 + $0x1b]]
        %s267 = sld [smem:[#allocation6 + $0x1f]]
        %s268 = sld [smem:[#allocation6 + $0x20]]
        %s269 = sld [smem:[#allocation6 + $0x24]]
        %s270 = sld [smem:[#allocation6 + $0x28]]
        %s271 = sld [smem:[#allocation6 + $0x2c]]
        %s272 = sld [smem:[#allocation6 + $0x30]]
        %s273 = sld [smem:[#allocation6 + $0x34]]
        %s274 = sld [smem:[#allocation6 + $0x38]]
        %s275 = sld [smem:[#allocation6 + $0x3c]]
        %s276 = sld [smem:[#allocation6 + $0x21]]
        %s277 = sld [smem:[#allocation6 + $0x25]]
        %s278 = sld [smem:[#allocation6 + $0x29]]
        %s279 = sld [smem:[#allocation6 + $0x2d]]
        %s280 = sld [smem:[#allocation6 + $0x31]]
        %s281 = sld [smem:[#allocation6 + $0x35]]
        %s282 = sld [smem:[#allocation6 + $0x39]]
        %s283 = sld [smem:[#allocation6 + $0x3d]]
        %s284 = sld [smem:[#allocation6 + $0x22]]
        %s285 = sld [smem:[#allocation6 + $0x26]]
        %s286 = sld [smem:[#allocation6 + $0x2a]]
        %s287 = sld [smem:[#allocation6 + $0x2e]]
        %s288 = sld [smem:[#allocation6 + $0x32]]
        %s289 = sld [smem:[#allocation6 + $0x36]]
        %s290 = sld [smem:[#allocation6 + $0x3a]]
        %s291 = sld [smem:[#allocation6 + $0x3e]]
        %s292 = sld [smem:[#allocation6 + $0x23]]
        %s293 = sld [smem:[#allocation6 + $0x27]]
        %s294 = sld [smem:[#allocation6 + $0x2b]]
        %s295 = sld [smem:[#allocation6 + $0x2f]]
        %s296 = sld [smem:[#allocation6 + $0x33]]
        %s297 = sld [smem:[#allocation6 + $0x37]]
        %s298 = sld [smem:[#allocation6 + $0x3b]]
        %s299 = sld [smem:[#allocation6 + $0x3f]]
        %s300 = sld [smem:[#allocation6 + $0x40]]
        %s301 = sld [smem:[#allocation6 + $0x44]]
        %s302 = sld [smem:[#allocation6 + $0x48]]
        %s303 = sld [smem:[#allocation6 + $0x4c]]
        %s304 = sld [smem:[#allocation6 + $0x50]]
        %s305 = sld [smem:[#allocation6 + $0x54]]
        %s306 = sld [smem:[#allocation6 + $0x58]]
        %s307 = sld [smem:[#allocation6 + $0x5c]]
        %s308 = sld [smem:[#allocation6 + $0x41]]
        %s309 = sld [smem:[#allocation6 + $0x45]]
        %s310 = sld [smem:[#allocation6 + $0x49]]
        %s311 = sld [smem:[#allocation6 + $0x4d]]
        %s312 = sld [smem:[#allocation6 + $0x51]]
        %s313 = sld [smem:[#allocation6 + $0x55]]
        %s314 = sld [smem:[#allocation6 + $0x59]]
        %s315 = sld [smem:[#allocation6 + $0x5d]]
        %s316 = sld [smem:[#allocation6 + $0x42]]
        %s317 = sld [smem:[#allocation6 + $0x46]]
        %s318 = sld [smem:[#allocation6 + $0x4a]]
        %s319 = sld [smem:[#allocation6 + $0x4e]]
        %s320 = sld [smem:[#allocation6 + $0x52]]
        %s321 = sld [smem:[#allocation6 + $0x56]]
        %s322 = sld [smem:[#allocation6 + $0x5a]]
        %s323 = sld [smem:[#allocation6 + $0x5e]]
        %s324 = sld [smem:[#allocation6 + $0x43]]
        %s325 = sld [smem:[#allocation6 + $0x47]]
        %s326 = sld [smem:[#allocation6 + $0x4b]]
        %s327 = sld [smem:[#allocation6 + $0x4f]]
        %s328 = sld [smem:[#allocation6 + $0x53]]
        %s329 = sld [smem:[#allocation6 + $0x57]]
        %s330 = sld [smem:[#allocation6 + $0x5b]]
        %s331 = sld [smem:[#allocation6 + $0x5f]]
        %s332 = sld [smem:[#allocation7]]
        %s333 = sld [smem:[#allocation7 + $0x1]]
        %s334 = sld [smem:[#allocation7 + $0x2]]
        %s335 = sld [smem:[#allocation7 + $0x3]]
        %s336 = sld [smem:[#allocation7 + $0x4]]
        %s337 = sld [smem:[#allocation7 + $0x5]]
        %s338 = sld [smem:[#allocation7 + $0x6]]
        %s339 = sld [smem:[#allocation7 + $0x7]]
        %v340 = vstv %s332
        %v341 = vstv %s333
        %v342 = vstv %s334
        %v343 = vstv %s335
        %v344 = vstv %s336
        %v345 = vstv %s337
        %v346 = vstv %s338
        %v347 = vstv %s339
        %v348 = vld [vmem:[%s202] sm:$0x3f]
        %v349 = vld [vmem:[%s202 + $0x8] sm:$0x3f]
        %v352 = vrot.slane %v348, 6
        %v353 = vrot.slane %v349, 6
        %vm356 = vcmask 1041408
        %v357 = vsel %vm356, 0.0, %v352
        %v358 = vsel %vm356, 0.0, %v353
        %v359 = vstv %s236
        %v360 = vmul.f32 %v359, %v357
        %v361 = vmul.f32 %v359, %v358
        %v362 = vadd.f32 %v340, %v360
        %v363 = vadd.f32 %v340, %v361
        %v364 = vstv %s237
        %v365 = vmul.f32 %v364, %v357
        %v366 = vmul.f32 %v364, %v358
        %v367 = vadd.f32 %v341, %v365
        %v368 = vadd.f32 %v341, %v366
        %v369 = vstv %s238
        %v370 = vmul.f32 %v369, %v357
        %v371 = vmul.f32 %v369, %v358
        %v372 = vadd.f32 %v342, %v370
        %v373 = vadd.f32 %v342, %v371
        %v374 = vstv %s239
        %v375 = vmul.f32 %v374, %v357
        %v376 = vmul.f32 %v374, %v358
        %v377 = vadd.f32 %v343, %v375
        %v378 = vadd.f32 %v343, %v376
        %v379 = vstv %s240
        %v380 = vmul.f32 %v379, %v357
        %v381 = vmul.f32 %v379, %v358
        %v382 = vadd.f32 %v344, %v380
        %v383 = vadd.f32 %v344, %v381
        %v384 = vstv %s241
        %v385 = vmul.f32 %v384, %v357
        %v386 = vmul.f32 %v384, %v358
        %v387 = vadd.f32 %v345, %v385
        %v388 = vadd.f32 %v345, %v386
        %v389 = vstv %s242
        %v390 = vmul.f32 %v389, %v357
        %v391 = vmul.f32 %v389, %v358
        %v392 = vadd.f32 %v346, %v390
        %v393 = vadd.f32 %v346, %v391
        %v394 = vstv %s243
        %v395 = vmul.f32 %v394, %v357
        %v396 = vmul.f32 %v394, %v358
        %v397 = vadd.f32 %v347, %v395
        %v398 = vadd.f32 %v347, %v396
        %v399 = vld [vmem:[%s202] sm:$0x7f]
        %v400 = vld [vmem:[%s202 + $0x8] sm:$0x7f]
        %v403 = vrot.slane %v399, 7
        %v404 = vrot.slane %v400, 7
        %vm407 = vcmask 1040384
        %v408 = vsel %vm407, 0.0, %v403
        %v409 = vsel %vm407, 0.0, %v404
        %v410 = vstv %s268
        %v411 = vmul.f32 %v410, %v408
        %v412 = vmul.f32 %v410, %v409
        %v413 = vadd.f32 %v362, %v411
        %v414 = vadd.f32 %v363, %v412
        %v415 = vstv %s269
        %v416 = vmul.f32 %v415, %v408
        %v417 = vmul.f32 %v415, %v409
        %v418 = vadd.f32 %v367, %v416
        %v419 = vadd.f32 %v368, %v417
        %v420 = vstv %s270
        %v421 = vmul.f32 %v420, %v408
        %v422 = vmul.f32 %v420, %v409
        %v423 = vadd.f32 %v372, %v421
        %v424 = vadd.f32 %v373, %v422
        %v425 = vstv %s271
        %v426 = vmul.f32 %v425, %v408
        %v427 = vmul.f32 %v425, %v409
        %v428 = vadd.f32 %v377, %v426
        %v429 = vadd.f32 %v378, %v427
        %v430 = vstv %s272
        %v431 = vmul.f32 %v430, %v408
        %v432 = vmul.f32 %v430, %v409
        %v433 = vadd.f32 %v382, %v431
        %v434 = vadd.f32 %v383, %v432
        %v435 = vstv %s273
        %v436 = vmul.f32 %v435, %v408
        %v437 = vmul.f32 %v435, %v409
        %v438 = vadd.f32 %v387, %v436
        %v439 = vadd.f32 %v388, %v437
        %v440 = vstv %s274
        %v441 = vmul.f32 %v440, %v408
        %v442 = vmul.f32 %v440, %v409
        %v443 = vadd.f32 %v392, %v441
        %v444 = vadd.f32 %v393, %v442
        %v445 = vstv %s275
        %v446 = vmul.f32 %v445, %v408
        %v447 = vmul.f32 %v445, %v409
        %v448 = vadd.f32 %v397, %v446
        %v449 = vadd.f32 %v398, %v447
        %v450 = vld [vmem:[%s202] sm:$0xff]
        %v451 = vld [vmem:[%s202 + $0x8] sm:$0xff]
        %v452 = vstv %s300
        %v453 = vmul.f32 %v452, %v450
        %v454 = vmul.f32 %v452, %v451
        %v455 = vadd.f32 %v413, %v453
        %v456 = vadd.f32 %v414, %v454
        %v457 = vstv %s301
        %v458 = vmul.f32 %v457, %v450
        %v459 = vmul.f32 %v457, %v451
        %v460 = vadd.f32 %v418, %v458
        %v461 = vadd.f32 %v419, %v459
        %v462 = vstv %s302
        %v463 = vmul.f32 %v462, %v450
        %v464 = vmul.f32 %v462, %v451
        %v465 = vadd.f32 %v423, %v463
        %v466 = vadd.f32 %v424, %v464
        %v467 = vstv %s303
        %v468 = vmul.f32 %v467, %v450
        %v469 = vmul.f32 %v467, %v451
        %v470 = vadd.f32 %v428, %v468
        %v471 = vadd.f32 %v429, %v469
        %v472 = vstv %s304
        %v473 = vmul.f32 %v472, %v450
        %v474 = vmul.f32 %v472, %v451
        %v475 = vadd.f32 %v433, %v473
        %v476 = vadd.f32 %v434, %v474
        %v477 = vstv %s305
        %v478 = vmul.f32 %v477, %v450
        %v479 = vmul.f32 %v477, %v451
        %v480 = vadd.f32 %v438, %v478
        %v481 = vadd.f32 %v439, %v479
        %v482 = vstv %s306
        %v483 = vmul.f32 %v482, %v450
        %v484 = vmul.f32 %v482, %v451
        %v485 = vadd.f32 %v443, %v483
        %v486 = vadd.f32 %v444, %v484
        %v487 = vstv %s307
        %v488 = vmul.f32 %v487, %v450
        %v489 = vmul.f32 %v487, %v451
        %v490 = vadd.f32 %v448, %v488
        %v491 = vadd.f32 %v449, %v489
        %s492 = scalar_lea.vmem %s202, 16 [#allocation2]
        %v493 = vld [vmem:[%s492] sm:$0x3f]
        %v494 = vld [vmem:[%s492 + $0x8] sm:$0x3f]
        %v497 = vrot.slane %v493, 6
        %v498 = vrot.slane %v494, 6
        %v501 = vsel %vm356, 0.0, %v497
        %v502 = vsel %vm356, 0.0, %v498
        %v503 = vstv %s244
        %v504 = vmul.f32 %v503, %v501
        %v505 = vmul.f32 %v503, %v502
        %v506 = vadd.f32 %v455, %v504
        %v507 = vadd.f32 %v456, %v505
        %v508 = vstv %s245
        %v509 = vmul.f32 %v508, %v501
        %v510 = vmul.f32 %v508, %v502
        %v511 = vadd.f32 %v460, %v509
        %v512 = vadd.f32 %v461, %v510
        %v513 = vstv %s246
        %v514 = vmul.f32 %v513, %v501
        %v515 = vmul.f32 %v513, %v502
        %v516 = vadd.f32 %v465, %v514
        %v517 = vadd.f32 %v466, %v515
        %v518 = vstv %s247
        %v519 = vmul.f32 %v518, %v501
        %v520 = vmul.f32 %v518, %v502
        %v521 = vadd.f32 %v470, %v519
        %v522 = vadd.f32 %v471, %v520
        %v523 = vstv %s248
        %v524 = vmul.f32 %v523, %v501
        %v525 = vmul.f32 %v523, %v502
        %v526 = vadd.f32 %v475, %v524
        %v527 = vadd.f32 %v476, %v525
        %v528 = vstv %s249
        %v529 = vmul.f32 %v528, %v501
        %v530 = vmul.f32 %v528, %v502
        %v531 = vadd.f32 %v480, %v529
        %v532 = vadd.f32 %v481, %v530
        %v533 = vstv %s250
        %v534 = vmul.f32 %v533, %v501
        %v535 = vmul.f32 %v533, %v502
        %v536 = vadd.f32 %v485, %v534
        %v537 = vadd.f32 %v486, %v535
        %v538 = vstv %s251
        %v539 = vmul.f32 %v538, %v501
        %v540 = vmul.f32 %v538, %v502
        %v541 = vadd.f32 %v490, %v539
        %v542 = vadd.f32 %v491, %v540
        %v543 = vld [vmem:[%s492] sm:$0x7f]
        %v544 = vld [vmem:[%s492 + $0x8] sm:$0x7f]
        %v547 = vrot.slane %v543, 7
        %v548 = vrot.slane %v544, 7
        %v551 = vsel %vm407, 0.0, %v547
        %v552 = vsel %vm407, 0.0, %v548
        %v553 = vstv %s276
        %v554 = vmul.f32 %v553, %v551
        %v555 = vmul.f32 %v553, %v552
        %v556 = vadd.f32 %v506, %v554
        %v557 = vadd.f32 %v507, %v555
        %v558 = vstv %s277
        %v559 = vmul.f32 %v558, %v551
        %v560 = vmul.f32 %v558, %v552
        %v561 = vadd.f32 %v511, %v559
        %v562 = vadd.f32 %v512, %v560
        %v563 = vstv %s278
        %v564 = vmul.f32 %v563, %v551
        %v565 = vmul.f32 %v563, %v552
        %v566 = vadd.f32 %v516, %v564
        %v567 = vadd.f32 %v517, %v565
        %v568 = vstv %s279
        %v569 = vmul.f32 %v568, %v551
        %v570 = vmul.f32 %v568, %v552
        %v571 = vadd.f32 %v521, %v569
        %v572 = vadd.f32 %v522, %v570
        %v573 = vstv %s280
        %v574 = vmul.f32 %v573, %v551
        %v575 = vmul.f32 %v573, %v552
        %v576 = vadd.f32 %v526, %v574
        %v577 = vadd.f32 %v527, %v575
        %v578 = vstv %s281
        %v579 = vmul.f32 %v578, %v551
        %v580 = vmul.f32 %v578, %v552
        %v581 = vadd.f32 %v531, %v579
        %v582 = vadd.f32 %v532, %v580
        %v583 = vstv %s282
        %v584 = vmul.f32 %v583, %v551
        %v585 = vmul.f32 %v583, %v552
        %v586 = vadd.f32 %v536, %v584
        %v587 = vadd.f32 %v537, %v585
        %v588 = vstv %s283
        %v589 = vmul.f32 %v588, %v551
        %v590 = vmul.f32 %v588, %v552
        %v591 = vadd.f32 %v541, %v589
        %v592 = vadd.f32 %v542, %v590
        %v593 = vld [vmem:[%s492] sm:$0xff]
        %v594 = vld [vmem:[%s492 + $0x8] sm:$0xff]
        %v595 = vstv %s308
        %v596 = vmul.f32 %v595, %v593
        %v597 = vmul.f32 %v595, %v594
        %v598 = vadd.f32 %v556, %v596
        %v599 = vadd.f32 %v557, %v597
        %v600 = vstv %s309
        %v601 = vmul.f32 %v600, %v593
        %v602 = vmul.f32 %v600, %v594
        %v603 = vadd.f32 %v561, %v601
        %v604 = vadd.f32 %v562, %v602
        %v605 = vstv %s310
        %v606 = vmul.f32 %v605, %v593
        %v607 = vmul.f32 %v605, %v594
        %v608 = vadd.f32 %v566, %v606
        %v609 = vadd.f32 %v567, %v607
        %v610 = vstv %s311
        %v611 = vmul.f32 %v610, %v593
        %v612 = vmul.f32 %v610, %v594
        %v613 = vadd.f32 %v571, %v611
        %v614 = vadd.f32 %v572, %v612
        %v615 = vstv %s312
        %v616 = vmul.f32 %v615, %v593
        %v617 = vmul.f32 %v615, %v594
        %v618 = vadd.f32 %v576, %v616
        %v619 = vadd.f32 %v577, %v617
        %v620 = vstv %s313
        %v621 = vmul.f32 %v620, %v593
        %v622 = vmul.f32 %v620, %v594
        %v623 = vadd.f32 %v581, %v621
        %v624 = vadd.f32 %v582, %v622
        %v625 = vstv %s314
        %v626 = vmul.f32 %v625, %v593
        %v627 = vmul.f32 %v625, %v594
        %v628 = vadd.f32 %v586, %v626
        %v629 = vadd.f32 %v587, %v627
        %v630 = vstv %s315
        %v631 = vmul.f32 %v630, %v593
        %v632 = vmul.f32 %v630, %v594
        %v633 = vadd.f32 %v591, %v631
        %v634 = vadd.f32 %v592, %v632
        %s635 = scalar_lea.vmem %s202, 32 [#allocation2]
        %v636 = vld [vmem:[%s635] sm:$0x3f]
        %v637 = vld [vmem:[%s635 + $0x8] sm:$0x3f]
        %v640 = vrot.slane %v636, 6
        %v641 = vrot.slane %v637, 6
        %v644 = vsel %vm356, 0.0, %v640
        %v645 = vsel %vm356, 0.0, %v641
        %v646 = vstv %s252
        %v647 = vmul.f32 %v646, %v644
        %v648 = vmul.f32 %v646, %v645
        %v649 = vadd.f32 %v598, %v647
        %v650 = vadd.f32 %v599, %v648
        %v651 = vstv %s253
        %v652 = vmul.f32 %v651, %v644
        %v653 = vmul.f32 %v651, %v645
        %v654 = vadd.f32 %v603, %v652
        %v655 = vadd.f32 %v604, %v653
        %v656 = vstv %s254
        %v657 = vmul.f32 %v656, %v644
        %v658 = vmul.f32 %v656, %v645
        %v659 = vadd.f32 %v608, %v657
        %v660 = vadd.f32 %v609, %v658
        %v661 = vstv %s255
        %v662 = vmul.f32 %v661, %v644
        %v663 = vmul.f32 %v661, %v645
        %v664 = vadd.f32 %v613, %v662
        %v665 = vadd.f32 %v614, %v663
        %v666 = vstv %s256
        %v667 = vmul.f32 %v666, %v644
        %v668 = vmul.f32 %v666, %v645
        %v669 = vadd.f32 %v618, %v667
        %v670 = vadd.f32 %v619, %v668
        %v671 = vstv %s257
        %v672 = vmul.f32 %v671, %v644
        %v673 = vmul.f32 %v671, %v645
        %v674 = vadd.f32 %v623, %v672
        %v675 = vadd.f32 %v624, %v673
        %v676 = vstv %s258
        %v677 = vmul.f32 %v676, %v644
        %v678 = vmul.f32 %v676, %v645
        %v679 = vadd.f32 %v628, %v677
        %v680 = vadd.f32 %v629, %v678
        %v681 = vstv %s259
        %v682 = vmul.f32 %v681, %v644
        %v683 = vmul.f32 %v681, %v645
        %v684 = vadd.f32 %v633, %v682
        %v685 = vadd.f32 %v634, %v683
        %v686 = vld [vmem:[%s635] sm:$0x7f]
        %v687 = vld [vmem:[%s635 + $0x8] sm:$0x7f]
        %v690 = vrot.slane %v686, 7
        %v691 = vrot.slane %v687, 7
        %v694 = vsel %vm407, 0.0, %v690
        %v695 = vsel %vm407, 0.0, %v691
        %v696 = vstv %s284
        %v697 = vmul.f32 %v696, %v694
        %v698 = vmul.f32 %v696, %v695
        %v699 = vadd.f32 %v649, %v697
        %v700 = vadd.f32 %v650, %v698
        %v701 = vstv %s285
        %v702 = vmul.f32 %v701, %v694
        %v703 = vmul.f32 %v701, %v695
        %v704 = vadd.f32 %v654, %v702
        %v705 = vadd.f32 %v655, %v703
        %v706 = vstv %s286
        %v707 = vmul.f32 %v706, %v694
        %v708 = vmul.f32 %v706, %v695
        %v709 = vadd.f32 %v659, %v707
        %v710 = vadd.f32 %v660, %v708
        %v711 = vstv %s287
        %v712 = vmul.f32 %v711, %v694
        %v713 = vmul.f32 %v711, %v695
        %v714 = vadd.f32 %v664, %v712
        %v715 = vadd.f32 %v665, %v713
        %v716 = vstv %s288
        %v717 = vmul.f32 %v716, %v694
        %v718 = vmul.f32 %v716, %v695
        %v719 = vadd.f32 %v669, %v717
        %v720 = vadd.f32 %v670, %v718
        %v721 = vstv %s289
        %v722 = vmul.f32 %v721, %v694
        %v723 = vmul.f32 %v721, %v695
        %v724 = vadd.f32 %v674, %v722
        %v725 = vadd.f32 %v675, %v723
        %v726 = vstv %s290
        %v727 = vmul.f32 %v726, %v694
        %v728 = vmul.f32 %v726, %v695
        %v729 = vadd.f32 %v679, %v727
        %v730 = vadd.f32 %v680, %v728
        %v731 = vstv %s291
        %v732 = vmul.f32 %v731, %v694
        %v733 = vmul.f32 %v731, %v695
        %v734 = vadd.f32 %v684, %v732
        %v735 = vadd.f32 %v685, %v733
        %v736 = vld [vmem:[%s635] sm:$0xff]
        %v737 = vld [vmem:[%s635 + $0x8] sm:$0xff]
        %v738 = vstv %s316
        %v739 = vmul.f32 %v738, %v736
        %v740 = vmul.f32 %v738, %v737
        %v741 = vadd.f32 %v699, %v739
        %v742 = vadd.f32 %v700, %v740
        %v743 = vstv %s317
        %v744 = vmul.f32 %v743, %v736
        %v745 = vmul.f32 %v743, %v737
        %v746 = vadd.f32 %v704, %v744
        %v747 = vadd.f32 %v705, %v745
        %v748 = vstv %s318
        %v749 = vmul.f32 %v748, %v736
        %v750 = vmul.f32 %v748, %v737
        %v751 = vadd.f32 %v709, %v749
        %v752 = vadd.f32 %v710, %v750
        %v753 = vstv %s319
        %v754 = vmul.f32 %v753, %v736
        %v755 = vmul.f32 %v753, %v737
        %v756 = vadd.f32 %v714, %v754
        %v757 = vadd.f32 %v715, %v755
        %v758 = vstv %s320
        %v759 = vmul.f32 %v758, %v736
        %v760 = vmul.f32 %v758, %v737
        %v761 = vadd.f32 %v719, %v759
        %v762 = vadd.f32 %v720, %v760
        %v763 = vstv %s321
        %v764 = vmul.f32 %v763, %v736
        %v765 = vmul.f32 %v763, %v737
        %v766 = vadd.f32 %v724, %v764
        %v767 = vadd.f32 %v725, %v765
        %v768 = vstv %s322
        %v769 = vmul.f32 %v768, %v736
        %v770 = vmul.f32 %v768, %v737
        %v771 = vadd.f32 %v729, %v769
        %v772 = vadd.f32 %v730, %v770
        %v773 = vstv %s323
        %v774 = vmul.f32 %v773, %v736
        %v775 = vmul.f32 %v773, %v737
        %v776 = vadd.f32 %v734, %v774
        %v777 = vadd.f32 %v735, %v775
        %s778 = scalar_lea.vmem %s202, 48 [#allocation2]
        %v779 = vld [vmem:[%s778] sm:$0x3f]
        %v780 = vld [vmem:[%s778 + $0x8] sm:$0x3f]
        %v783 = vrot.slane %v779, 6
        %v784 = vrot.slane %v780, 6
        %v787 = vsel %vm356, 0.0, %v783
        %v788 = vsel %vm356, 0.0, %v784
        %v789 = vstv %s260
        %v790 = vmul.f32 %v789, %v787
        %v791 = vmul.f32 %v789, %v788
        %v792 = vadd.f32 %v741, %v790
        %v793 = vadd.f32 %v742, %v791
        %v794 = vstv %s261
        %v795 = vmul.f32 %v794, %v787
        %v796 = vmul.f32 %v794, %v788
        %v797 = vadd.f32 %v746, %v795
        %v798 = vadd.f32 %v747, %v796
        %v799 = vstv %s262
        %v800 = vmul.f32 %v799, %v787
        %v801 = vmul.f32 %v799, %v788
        %v802 = vadd.f32 %v751, %v800
        %v803 = vadd.f32 %v752, %v801
        %v804 = vstv %s263
        %v805 = vmul.f32 %v804, %v787
        %v806 = vmul.f32 %v804, %v788
        %v807 = vadd.f32 %v756, %v805
        %v808 = vadd.f32 %v757, %v806
        %v809 = vstv %s264
        %v810 = vmul.f32 %v809, %v787
        %v811 = vmul.f32 %v809, %v788
        %v812 = vadd.f32 %v761, %v810
        %v813 = vadd.f32 %v762, %v811
        %v814 = vstv %s265
        %v815 = vmul.f32 %v814, %v787
        %v816 = vmul.f32 %v814, %v788
        %v817 = vadd.f32 %v766, %v815
        %v818 = vadd.f32 %v767, %v816
        %v819 = vstv %s266
        %v820 = vmul.f32 %v819, %v787
        %v821 = vmul.f32 %v819, %v788
        %v822 = vadd.f32 %v771, %v820
        %v823 = vadd.f32 %v772, %v821
        %v824 = vstv %s267
        %v825 = vmul.f32 %v824, %v787
        %v826 = vmul.f32 %v824, %v788
        %v827 = vadd.f32 %v776, %v825
        %v828 = vadd.f32 %v777, %v826
        %v829 = vld [vmem:[%s778] sm:$0x7f]
        %v830 = vld [vmem:[%s778 + $0x8] sm:$0x7f]
        %v833 = vrot.slane %v829, 7
        %v834 = vrot.slane %v830, 7
        %v837 = vsel %vm407, 0.0, %v833
        %v838 = vsel %vm407, 0.0, %v834
        %v839 = vstv %s292
        %v840 = vmul.f32 %v839, %v837
        %v841 = vmul.f32 %v839, %v838
        %v842 = vadd.f32 %v792, %v840
        %v843 = vadd.f32 %v793, %v841
        %v844 = vstv %s293
        %v845 = vmul.f32 %v844, %v837
        %v846 = vmul.f32 %v844, %v838
        %v847 = vadd.f32 %v797, %v845
        %v848 = vadd.f32 %v798, %v846
        %v849 = vstv %s294
        %v850 = vmul.f32 %v849, %v837
        %v851 = vmul.f32 %v849, %v838
        %v852 = vadd.f32 %v802, %v850
        %v853 = vadd.f32 %v803, %v851
        %v854 = vstv %s295
        %v855 = vmul.f32 %v854, %v837
        %v856 = vmul.f32 %v854, %v838
        %v857 = vadd.f32 %v807, %v855
        %v858 = vadd.f32 %v808, %v856
        %v859 = vstv %s296
        %v860 = vmul.f32 %v859, %v837
        %v861 = vmul.f32 %v859, %v838
        %v862 = vadd.f32 %v812, %v860
        %v863 = vadd.f32 %v813, %v861
        %v864 = vstv %s297
        %v865 = vmul.f32 %v864, %v837
        %v866 = vmul.f32 %v864, %v838
        %v867 = vadd.f32 %v817, %v865
        %v868 = vadd.f32 %v818, %v866
        %v869 = vstv %s298
        %v870 = vmul.f32 %v869, %v837
        %v871 = vmul.f32 %v869, %v838
        %v872 = vadd.f32 %v822, %v870
        %v873 = vadd.f32 %v823, %v871
        %v874 = vstv %s299
        %v875 = vmul.f32 %v874, %v837
        %v876 = vmul.f32 %v874, %v838
        %v877 = vadd.f32 %v827, %v875
        %v878 = vadd.f32 %v828, %v876
        %v879 = vld [vmem:[%s778] sm:$0xff]
        %v880 = vld [vmem:[%s778 + $0x8] sm:$0xff]
        %v881 = vstv %s324
        %v882 = vmul.f32 %v881, %v879
        %v883 = vmul.f32 %v881, %v880
        %v884 = vadd.f32 %v842, %v882
        %v885 = vadd.f32 %v843, %v883
        %v886 = vstv %s325
        %v887 = vmul.f32 %v886, %v879
        %v888 = vmul.f32 %v886, %v880
        %v889 = vadd.f32 %v847, %v887
        %v890 = vadd.f32 %v848, %v888
        %v891 = vstv %s326
        %v892 = vmul.f32 %v891, %v879
        %v893 = vmul.f32 %v891, %v880
        %v894 = vadd.f32 %v852, %v892
        %v895 = vadd.f32 %v853, %v893
        %v896 = vstv %s327
        %v897 = vmul.f32 %v896, %v879
        %v898 = vmul.f32 %v896, %v880
        %v899 = vadd.f32 %v857, %v897
        %v900 = vadd.f32 %v858, %v898
        %v901 = vstv %s328
        %v902 = vmul.f32 %v901, %v879
        %v903 = vmul.f32 %v901, %v880
        %v904 = vadd.f32 %v862, %v902
        %v905 = vadd.f32 %v863, %v903
        %v906 = vstv %s329
        %v907 = vmul.f32 %v906, %v879
        %v908 = vmul.f32 %v906, %v880
        %v909 = vadd.f32 %v867, %v907
        %v910 = vadd.f32 %v868, %v908
        %v911 = vstv %s330
        %v912 = vmul.f32 %v911, %v879
        %v913 = vmul.f32 %v911, %v880
        %v914 = vadd.f32 %v872, %v912
        %v915 = vadd.f32 %v873, %v913
        %v916 = vstv %s331
        %v917 = vmul.f32 %v916, %v879
        %v918 = vmul.f32 %v916, %v880
        %v919 = vadd.f32 %v877, %v917
        %v920 = vadd.f32 %v878, %v918
        %921 = vst [vmem:[%s233] sm:$0xff] %v884
        %922 = vst [vmem:[%s233 + $0x8] sm:$0xff] %v885
        %s923 = scalar_lea.vmem %s233, 16 [#allocation9]
        %924 = vst [vmem:[%s923] sm:$0xff] %v889
        %925 = vst [vmem:[%s923 + $0x8] sm:$0xff] %v890
        %s926 = scalar_lea.vmem %s233, 32 [#allocation9]
        %927 = vst [vmem:[%s926] sm:$0xff] %v894
        %928 = vst [vmem:[%s926 + $0x8] sm:$0xff] %v895
        %s929 = scalar_lea.vmem %s233, 48 [#allocation9]
        %930 = vst [vmem:[%s929] sm:$0xff] %v899
        %931 = vst [vmem:[%s929 + $0x8] sm:$0xff] %v900
        %s932 = scalar_lea.vmem %s233, 64 [#allocation9]
        %933 = vst [vmem:[%s932] sm:$0xff] %v904
        %934 = vst [vmem:[%s932 + $0x8] sm:$0xff] %v905
        %s935 = scalar_lea.vmem %s233, 80 [#allocation9]
        %936 = vst [vmem:[%s935] sm:$0xff] %v909
        %937 = vst [vmem:[%s935 + $0x8] sm:$0xff] %v910
        %s938 = scalar_lea.vmem %s233, 96 [#allocation9]
        %939 = vst [vmem:[%s938] sm:$0xff] %v914
        %940 = vst [vmem:[%s938 + $0x8] sm:$0xff] %v915
        %s941 = scalar_lea.vmem %s233, 112 [#allocation9]
        %942 = vst [vmem:[%s941] sm:$0xff] %v919
        %943 = vst [vmem:[%s941 + $0x8] sm:$0xff] %v920
        %s944 = sand.u32 %s114, 1
        %s945 = scalar_lea.sflag [#allocation4], %s944
        %s946 = sand.u32 %s114, 1
        %s947 = smul.addr %s946, 128
        %s948 = scalar_lea.vmem [#allocation9], %s947
        // Predicated region
        $region45: #{tpu_custom_call.1} parent=31 // pred_check
          %p949 = pneg %p124
        $region46: #{tpu_custom_call.1} parent=31 // pred_check_branch
          %951 = sbr.rel (%p949) target = $region48
        $region47: #{tpu_custom_call.1} parent=31 // pred_region
          %s952 = smul.u32 2, %s27
          %s954 = ssub.s32 2048, 2048
          %955 = vsyncadd %s945, %s954
          %s956 = smul.addr %s26, 16
          %s957 = sadd.s32 %s952, %s956
          %s958 = smul.addr %s957, 128
          %s959 = scalar_lea.hbm %s3, %s958
          %s960 = sshll.u32 %s948, 4
          %s961 = int_to_ptr.vmem [resolvable:$true] %s960
          %966 = dma.vmem_to_hbm [thread:$0]  %s961, 2048, %s959, %s945, 256, 256, 16
        $region48: #{tpu_custom_call.1} parent=31 // pred_fallthru
          _
      $region32: #{tpu_custom_call.1} parent=5 // pred_fallthru
        _
      %p967 = scmp.le.s32.totalorder 2, %s17
      // Predicated region
      $region49: #{tpu_custom_call.1} parent=5 // pred_check
        %p968 = pneg %p967
      $region50: #{tpu_custom_call.1} parent=5 // pred_check_branch
        %970 = sbr.rel (%p968) target = $region52
      $region51: #{tpu_custom_call.1} parent=5 // pred_region
        %s971 = ssub.s32 %s17, 2
        // Predicated region
        $region53: #{tpu_custom_call.1} parent=51 // pred_check
          %p972 = pneg %p130
        $region54: #{tpu_custom_call.1} parent=51 // pred_check_branch
          %974 = sbr.rel (%p972) target = $region56
        $region55: #{tpu_custom_call.1} parent=51 // pred_region
          %s975 = sand.u32 %s115, 1
          %s976 = scalar_lea.sflag [#allocation4], %s975
          %s977 = sand.u32 %s115, 1
          %s978 = smul.addr %s977, 128
          %s979 = scalar_lea.vmem [#allocation9], %s978
          %980 = dma.done %s976, 2048
        $region56: #{tpu_custom_call.1} parent=51 // pred_fallthru
          _
      $region52: #{tpu_custom_call.1} parent=5 // pred_fallthru
        _
    $region6: #{tpu_custom_call.1} parent=1 // loop_footer
      %s21 = sadd.s32 1, %s17
    $region7: #{tpu_custom_call.1} parent=1 // loop_footer_branch
      %16 = sbr.rel target = $region3
    $region8: #{tpu_custom_call.1} parent=1 // loop_exit
      _
    %981 = vsyncpa [#allocation3], 1
    %s982 = scalar_lea.sflag [#allocation3], 1
    %983 = vsyncpa %s982, 1
    %984 = vsyncpa [#allocation4], 1
    %s985 = scalar_lea.sflag [#allocation4], 1
    %986 = vsyncpa %s985, 1
    %987 = vsyncpa [#allocation5], 1
    %s988 = scalar_lea.sflag [#allocation5], 1
    %989 = vsyncpa %s988, 1
    %990 = vsyncpa [#allocation8], 1

</llo_original>
